<compile_context>
chip_gen: v6e
topology: v6e:2x2x1
jax: 0.10.0
libtpu: 0.0.40
codegen_flags: <defaults>
</compile_context>

<pallas_src>
import functools

import jax
import jax.numpy as jnp
from jax.experimental import pallas as pl
from jax.experimental.pallas import tpu as pltpu


LEAK = 0.05                      # F.leaky_relu(x, 0.05) in the PyTorch spec
VMEM_LIMIT = 32 * 1024 * 1024    # > v5e's 16 MiB default scoped limit, safe on v7x


def _round_up(x, m):
    return ((x + m - 1) // m) * m


def _pick_tm(M):
    """Pick an M-tile that divides M exactly (no pad / no output slice).

    Keeps tiles big (<=512 rows, ~85% of HBM roofline on single-TC v5e/v6e)
    while producing >=2 grid blocks whenever M > 256 so v7x's two TensorCores
    both get work on the 'parallel' grid axis.
    """
    if M <= 256 or M % 8 != 0:
        return M                               # single full-extent block
    best = None
    for t in range(128, min(512, M // 2) + 1, 8):
        if M % t == 0:
            best = t
    return best if best is not None else M


# ----------------------------------------------------------------------------
# Pallas kernels
# ----------------------------------------------------------------------------
def _fused_conv_kernel(p_ref, w_ref, s_ref, b_ref, o_ref, *, apply_act):
    # p_ref: (tm, K) bf16 patches   w_ref: (K, N) bf16 weight (N lane-dense)
    # s_ref/b_ref: (1, N) f32 folded BN scale / shift (+ conv bias)
    acc = jnp.dot(p_ref[...], w_ref[...], preferred_element_type=jnp.float32)
    y = acc * s_ref[...] + b_ref[...]
    if apply_act:
        y = jnp.where(y > 0, y, LEAK * y)          # leaky_relu(0.05)
    o_ref[...] = y.astype(o_ref.dtype)


def _tail_kernel(p3_ref, w3_ref, s3_ref, b3_ref, w4_ref, s4_ref, b4_ref,
                 w5_ref, b5_ref, o_ref, acc_ref):
    # Fused conv3 + BN + leaky + conv4 (4x4 valid) + BN + leaky + fc1 (1x1).
    # Grid axis = the 16 conv4 spatial taps ('arbitrary'); acc_ref is the f32
    # conv4 accumulator (B, C4) living in VMEM across the whole grid.
    p = pl.program_id(0)

    @pl.when(p == 0)
    def _():
        acc_ref[...] = jnp.zeros_like(acc_ref)

    # conv3 at spatial position p: (B, K3) @ (K3, C3), folded BN, leaky.
    h3 = jnp.dot(p3_ref[...], w3_ref[...], preferred_element_type=jnp.float32)
    h3 = h3 * s3_ref[...] + b3_ref[...]
    h3 = jnp.where(h3 > 0, h3, LEAK * h3)
    # conv4 tap-p contribution (valid 4x4 conv == sum over the 16 positions).
    acc_ref[...] += jnp.dot(h3.astype(w4_ref.dtype), w4_ref[...],
                            preferred_element_type=jnp.float32)

    @pl.when(p == pl.num_programs(0) - 1)
    def _():
        h4 = acc_ref[...] * s4_ref[...] + b4_ref[...]
        h4 = jnp.where(h4 > 0, h4, LEAK * h4)
        out = jnp.dot(h4.astype(w5_ref.dtype), w5_ref[...],
                      preferred_element_type=jnp.float32)
        o_ref[...] = (out + b5_ref[...]).astype(o_ref.dtype)


# ----------------------------------------------------------------------------
# Pallas call wrappers
# ----------------------------------------------------------------------------
def fused_matmul(patches, weight, scale, shift, *, apply_act, out_dtype):
    """out[M,N] = act( patches[M,K] @ weight[K,N] * scale + shift ).

    bf16 MXU operands, f32 accumulation / epilogue, out_dtype store.
    K and N blocks are full-extent; only M is tiled, with tm | M (no padding).
    """
    M, K = patches.shape
    _, N = weight.shape
    tm = _pick_tm(M)

    p = patches.astype(jnp.bfloat16)
    w = weight.astype(jnp.bfloat16)
    s = scale.reshape(1, N).astype(jnp.float32)
    b = shift.reshape(1, N).astype(jnp.float32)

    out_bytes = jnp.dtype(out_dtype).itemsize
    cost = pl.CostEstimate(
        flops=2 * M * K * N + 4 * M * N,
        transcendentals=0,
        bytes_accessed=M * K * 2 + K * N * 2 + M * N * out_bytes + 8 * N)

    return pl.pallas_call(
        functools.partial(_fused_conv_kernel, apply_act=apply_act),
        out_shape=jax.ShapeDtypeStruct((M, N), out_dtype),
        grid=(M // tm,),
        in_specs=[
            pl.BlockSpec((tm, K), lambda i: (i, 0)),
            pl.BlockSpec((K, N), lambda i: (0, 0)),
            pl.BlockSpec((1, N), lambda i: (0, 0)),
            pl.BlockSpec((1, N), lambda i: (0, 0)),
        ],
        out_specs=pl.BlockSpec((tm, N), lambda i: (i, 0)),
        compiler_params=pltpu.CompilerParams(
            dimension_semantics=("parallel",),
            vmem_limit_bytes=VMEM_LIMIT),
        cost_estimate=cost,
    )(p, w, s, b)


def fused_tail(x_nhwc, l3, l4, l5):
    """conv3(5x5,s2,p2)+BN+leaky + conv4(4x4,valid)+BN+leaky + fc1(1x1), fused.

    Requires conv3's output spatial extent to equal conv4's kernel (the
    standard 32x32 path: 8x8 -> 4x4 -> 1x1).  One pallas_call with a 16-step
    tap-reduction grid and an f32 VMEM accumulator; no intermediate activation
    touches HBM.
    """
    B = x_nhwc.shape[0]
    C2 = l3["w"].shape[1]
    if x_nhwc.shape[-1] != C2:
        x_nhwc = x_nhwc[..., :C2]              # strip lane-padding channels

    k3 = l3["w"].shape[2]
    patches3, Ho, Wo = _im2col(x_nhwc, k3, l3["stride"], l3["pad"])  # (B*P, K3)
    P = Ho * Wo                                                      # 16
    K3 = patches3.shape[1]
    # Order rows (spatial position, batch) so the tap grid indexes the lead dim.
    patches3 = patches3.reshape(B, P, K3).transpose(1, 0, 2)          # (P, B, K3)

    C3 = l3["w"].shape[0]
    w3 = jnp.transpose(l3["w"], (2, 3, 1, 0)).reshape(K3, C3)
    s3, b3 = _bn_scale_shift(l3)

    C4 = l4["w"].shape[0]
    w4 = jnp.transpose(l4["w"], (2, 3, 1, 0)).reshape(P, C3, C4)      # per-tap
    s4, b4 = _bn_scale_shift(l4)

    N = l5["w"].shape[0]
    w5 = jnp.transpose(l5["w"], (2, 3, 1, 0)).reshape(C4, N)
    b5 = l5["b"]

    cost = pl.CostEstimate(
        flops=2 * P * B * K3 * C3 + 2 * P * B * C3 * C4 + 2 * B * C4 * N,
        transcendentals=0,
        bytes_accessed=(P * B * K3 + K3 * C3 + P * C3 * C4 + C4 * N) * 2
                       + B * N * 4)

    return pl.pallas_call(
        _tail_kernel,
        out_shape=jax.ShapeDtypeStruct((B, N), jnp.float32),
        grid=(P,),
        in_specs=[
            pl.BlockSpec((None, B, K3), lambda p: (p, 0, 0)),
            pl.BlockSpec((K3, C3), lambda p: (0, 0)),
            pl.BlockSpec((1, C3), lambda p: (0, 0)),
            pl.BlockSpec((1, C3), lambda p: (0, 0)),
            pl.BlockSpec((None, C3, C4), lambda p: (p, 0, 0)),
            pl.BlockSpec((1, C4), lambda p: (0, 0)),
            pl.BlockSpec((1, C4), lambda p: (0, 0)),
            pl.BlockSpec((C4, N), lambda p: (0, 0)),
            pl.BlockSpec((1, N), lambda p: (0, 0)),
        ],
        out_specs=pl.BlockSpec((B, N), lambda p: (0, 0)),
        scratch_shapes=[pltpu.VMEM((B, C4), jnp.float32)],
        compiler_params=pltpu.CompilerParams(
            dimension_semantics=("arbitrary",),
            vmem_limit_bytes=VMEM_LIMIT),
        cost_estimate=cost,
    )(patches3.astype(jnp.bfloat16),
      w3.astype(jnp.bfloat16),
      s3.reshape(1, C3).astype(jnp.float32),
      b3.reshape(1, C3).astype(jnp.float32),
      w4.astype(jnp.bfloat16),
      s4.reshape(1, C4).astype(jnp.float32),
      b4.reshape(1, C4).astype(jnp.float32),
      w5.astype(jnp.bfloat16),
      b5.reshape(1, N).astype(jnp.float32))


# ----------------------------------------------------------------------------
# Layer glue (im2col in plain JAX, fused under jit; matmul+BN+act in Pallas)
# ----------------------------------------------------------------------------
def _im2col(x_nhwc, k, stride, pad):
    B, H, W, Cin = x_nhwc.shape
    Ho = (H + 2 * pad - k) // stride + 1
    Wo = (W + 2 * pad - k) // stride + 1
    xp = jnp.pad(x_nhwc, ((0, 0), (pad, pad), (pad, pad), (0, 0)))
    cols = []
    for kh in range(k):
        for kw in range(k):
            cols.append(xp[:, kh:kh + stride * Ho:stride,
                           kw:kw + stride * Wo:stride, :])
    patches = jnp.stack(cols, axis=3).reshape(B * Ho * Wo, k * k * Cin)
    return patches, Ho, Wo


def _bn_scale_shift(layer):
    cout = layer["w"].shape[0]
    if layer["bn"]:
        inv_std = layer["gamma"] / jnp.sqrt(layer["rv"] + 1e-5)
        return inv_std, layer["beta"] + (layer["b"] - layer["rm"]) * inv_std
    return jnp.ones((cout,), jnp.float32), layer["b"]


def conv_layer(x_nhwc, layer, *, apply_act, out_dtype, pad_lanes):
    w = layer["w"]                           # (Cout, Cin, K, K)  PyTorch OIHW
    Cout, Cin, K, _ = w.shape
    if x_nhwc.shape[-1] != Cin:              # drop lane-padding channels (fuses
        x_nhwc = x_nhwc[..., :Cin]           # into the im2col gather under jit)
    patches, Ho, Wo = _im2col(x_nhwc, K, layer["stride"], layer["pad"])
    wm = jnp.transpose(w, (2, 3, 1, 0)).reshape(K * K * Cin, Cout)
    scale, shift = _bn_scale_shift(layer)
    # Lane-dense output: pad Cout to a 128 multiple with zero columns so every
    # store is an unmasked vst.  Padded channels are exact zeros.
    Np = _round_up(Cout, 128) if pad_lanes else Cout
    if Np != Cout:
        wm = jnp.pad(wm, ((0, 0), (0, Np - Cout)))
        scale = jnp.pad(scale, (0, Np - Cout))
        shift = jnp.pad(shift, (0, Np - Cout))
    out = fused_matmul(patches, wm, scale, shift,
                       apply_act=apply_act, out_dtype=out_dtype)
    return out.reshape(x_nhwc.shape[0], Ho, Wo, Np)


def d2_forward(x_nchw, params):
    # NCHW -> NHWC, bf16 MXU operands from the start.
    x = jnp.transpose(x_nchw, (0, 2, 3, 1)).astype(jnp.bfloat16)
    l1, l2, l3, l4, l5 = params

    # conv1, conv2 (5x5, stride 2, pad 2) + BN + leaky_relu(0.05); bf16,
    # lane-dense outputs.
    x = conv_layer(x, l1, apply_act=True, out_dtype=jnp.bfloat16, pad_lanes=True)
    x = conv_layer(x, l2, apply_act=True, out_dtype=jnp.bfloat16, pad_lanes=True)

    B, H, W, _ = x.shape
    K4 = l4["w"].shape[2]
    k3, s3_, p3_ = l3["w"].shape[2], l3["stride"], l3["pad"]
    Ho3 = (H + 2 * p3_ - k3) // s3_ + 1
    Wo3 = (W + 2 * p3_ - k3) // s3_ + 1
    std_tail = (Ho3 == K4 and Wo3 == K4
                and l4["stride"] == 1 and l4["pad"] == 0
                and l5["w"].shape[2] == 1 and l5["stride"] == 1
                and l5["pad"] == 0 and B <= 2048)
    if std_tail:
        # conv3 + conv4 + fc1 fused into one pallas_call.
        return jnp.squeeze(fused_tail(x, l3, l4, l5))

    # Generic fallback (non-standard spatial sizes / very large batch).
    x = conv_layer(x, l3, apply_act=True, out_dtype=jnp.bfloat16, pad_lanes=True)
    x = conv_layer(x, l4, apply_act=True, out_dtype=jnp.bfloat16, pad_lanes=True)
    x = conv_layer(x, l5, apply_act=False, out_dtype=jnp.float32, pad_lanes=False)
    return jnp.squeeze(x)


# ----------------------------------------------------------------------------
# Deterministic parameter init (shapes from D2.__init__, conv_dim configurable)
# ----------------------------------------------------------------------------
def init_params(key, conv_dim):
    specs = [
        # (cin, cout, k, stride, pad, bn)
        (3, conv_dim, 5, 2, 2, True),
        (conv_dim, conv_dim * 2, 5, 2, 2, True),
        (conv_dim * 2, conv_dim * 4, 5, 2, 2, True),
        (conv_dim * 4, conv_dim * 8, 4, 1, 0, True),
        (conv_dim * 8, 11, 1, 1, 0, False),
    ]
    params = []
    for (cin, cout, k, stride, pad, bn) in specs:
        key, k1, k2, k3, k4, k5, k6 = jax.random.split(key, 7)
        fan_in = cin * k * k
        layer = dict(
            w=jax.random.normal(k1, (cout, cin, k, k), jnp.float32)
              * (1.0 / fan_in) ** 0.5,
            b=0.1 * jax.random.normal(k2, (cout,), jnp.float32),
            stride=stride, pad=pad, bn=bn,
        )
        if bn:
            layer["gamma"] = 1.0 + 0.1 * jax.random.normal(k3, (cout,), jnp.float32)
            layer["beta"] = 0.1 * jax.random.normal(k4, (cout,), jnp.float32)
            layer["rm"] = 0.1 * jax.random.normal(k5, (cout,), jnp.float32)
            layer["rv"] = 0.5 + 0.5 * jnp.abs(
                jax.random.normal(k6, (cout,), jnp.float32))
        params.append(layer)
    return params


# ----------------------------------------------------------------------------
# Pure-JAX reference (lax conv with the same precision policy: bf16 operands,
# f32 accumulation, bf16 intermediate activations, f32 final logits)
# ----------------------------------------------------------------------------
def d2_reference(x_nchw, params):
    x = jnp.transpose(x_nchw, (0, 2, 3, 1)).astype(jnp.bfloat16)
    n = len(params)
    for i, layer in enumerate(params):
        w_hwio = jnp.transpose(layer["w"], (2, 3, 1, 0)).astype(jnp.bfloat16)
        pad = layer["pad"]
        y = jax.lax.conv_general_dilated(
            x.astype(jnp.bfloat16), w_hwio,
            (layer["stride"], layer["stride"]), [(pad, pad), (pad, pad)],
            dimension_numbers=("NHWC", "HWIO", "NHWC"),
            preferred_element_type=jnp.float32)
        y = y + layer["b"]
        if layer["bn"]:
            y = (y - layer["rm"]) / jnp.sqrt(layer["rv"] + 1e-5) \
                * layer["gamma"] + layer["beta"]
        if i < n - 1:
            y = jnp.where(y > 0, y, LEAK * y).astype(jnp.bfloat16)
        x = y
    return jnp.squeeze(x).astype(jnp.float32)


if __name__ == "__main__":
    key = jax.random.PRNGKey(0)
    k_param, k_x = jax.random.split(key)

    conv_dim = 16  # small version of the default 64
    params = init_params(k_param, conv_dim)

    # MNIST-style 3x32x32 input so the spatial pipeline 32->16->8->4->1 holds.
    x = jax.random.normal(k_x, (2, 3, 32, 32), jnp.float32)

    fwd = jax.jit(lambda inp: d2_forward(inp, params))
    out = jax.block_until_ready(fwd(x))

    ref = jax.block_until_ready(jax.jit(lambda inp: d2_reference(inp, params))(x))
    assert out.shape == (2, 11), out.shape
    max_err = float(jnp.max(jnp.abs(out - ref)))
    # bf16 operands + bf16 intermediate activations -> looser tolerance than a
    # pure-f32 check; the reference uses the identical precision policy.
    assert jnp.allclose(out, ref, rtol=3e-2, atol=3e-2), max_err

    print("KERNEL_OK")
</pallas_src>

<mosaic_0001>
module attributes {stable_mosaic.version = 11 : i64} {
  func.func @_fused_conv_kernel(%arg0: i32, %arg1: memref<256x75xbf16, #tpu.memory_space<vmem>>, %arg2: memref<75x128xbf16, #tpu.memory_space<vmem>>, %arg3: memref<1x128xf32, #tpu.memory_space<vmem>>, %arg4: memref<1x128xf32, #tpu.memory_space<vmem>>, %arg5: memref<256x128xbf16, #tpu.memory_space<vmem>>) attributes {dimension_semantics = [#tpu.dimension_semantics<parallel>], iteration_bounds = array<i64: 2>, scalar_prefetch = 0 : i64, scratch_operands = 0 : i64, tpu.core_type = #tpu.core_type<tc>, window_params = [{transform_indices = @transform_0, window_bounds = array<i64: 256, 75>}, {pipeline_mode = #tpu.pipeline_mode<synchronous>, transform_indices = @transform_1, window_bounds = array<i64: 75, 128>}, {pipeline_mode = #tpu.pipeline_mode<synchronous>, transform_indices = @transform_2, window_bounds = array<i64: 1, 128>}, {pipeline_mode = #tpu.pipeline_mode<synchronous>, transform_indices = @transform_3, window_bounds = array<i64: 1, 128>}, {transform_indices = @transform_4, window_bounds = array<i64: 256, 128>}]} {
    %c0 = arith.constant 0 : index
    %c0_0 = arith.constant 0 : index
    %0 = vector.load %arg1[%c0, %c0_0] : memref<256x75xbf16, #tpu.memory_space<vmem>>, vector<256x75xbf16>
    %c0_1 = arith.constant 0 : index
    %c0_2 = arith.constant 0 : index
    %1 = vector.load %arg2[%c0_1, %c0_2] : memref<75x128xbf16, #tpu.memory_space<vmem>>, vector<75x128xbf16>
    %cst = arith.constant dense<0.000000e+00> : vector<256x128xf32>
    %2 = tpu.matmul %0, %1, %cst {dimension_numbers = #tpu.dot_dimension_numbers<[1], [0], [0], [1], [0, 0, 1, 1], [], []>} : vector<256x75xbf16>, vector<75x128xbf16>, vector<256x128xf32> -> vector<256x128xf32>
    %c0_3 = arith.constant 0 : index
    %c0_4 = arith.constant 0 : index
    %3 = vector.load %arg3[%c0_3, %c0_4] : memref<1x128xf32, #tpu.memory_space<vmem>>, vector<1x128xf32>
    %4 = vector.broadcast %3 : vector<1x128xf32> to vector<256x128xf32>
    %5 = arith.mulf %2, %4 : vector<256x128xf32>
    %c0_5 = arith.constant 0 : index
    %c0_6 = arith.constant 0 : index
    %6 = vector.load %arg4[%c0_5, %c0_6] : memref<1x128xf32, #tpu.memory_space<vmem>>, vector<1x128xf32>
    %7 = vector.broadcast %6 : vector<1x128xf32> to vector<256x128xf32>
    %8 = arith.addf %5, %7 : vector<256x128xf32>
    %cst_7 = arith.constant 0.000000e+00 : f32
    %9 = vector.broadcast %cst_7 : f32 to vector<256x128xf32>
    %10 = arith.cmpf ogt, %8, %9 : vector<256x128xf32>
    %cst_8 = arith.constant 5.000000e-02 : f32
    %11 = vector.broadcast %cst_8 : f32 to vector<256x128xf32>
    %12 = arith.mulf %11, %8 : vector<256x128xf32>
    %13 = arith.select %10, %8, %12 : vector<256x128xi1>, vector<256x128xf32>
    %14 = arith.truncf %13 : vector<256x128xf32> to vector<256x128xbf16>
    %c0_9 = arith.constant 0 : index
    %c0_10 = arith.constant 0 : index
    %15 = vector.load %arg5[%c0_9, %c0_10] : memref<256x128xbf16, #tpu.memory_space<vmem>>, vector<256x128xbf16>
    tpu.vector_store %arg5[%c0_9, %c0_10], %14 {strides = array<i32>} : memref<256x128xbf16, #tpu.memory_space<vmem>>, vector<256x128xbf16>,
    return
  }
  func.func @transform_0(%arg0: i32) -> (i32, i32) {
    %c0_i32 = arith.constant 0 : i32
    %c0_i32_0 = arith.constant 0 : i32
    return %arg0, %c0_i32 : i32, i32
  }
  func.func @transform_1(%arg0: i32) -> (i32, i32) {
    %c0_i32 = arith.constant 0 : i32
    %c0_i32_0 = arith.constant 0 : i32
    %c0_i32_1 = arith.constant 0 : i32
    return %c0_i32, %c0_i32_0 : i32, i32
  }
  func.func @transform_2(%arg0: i32) -> (i32, i32) {
    %c0_i32 = arith.constant 0 : i32
    %c0_i32_0 = arith.constant 0 : i32
    %c0_i32_1 = arith.constant 0 : i32
    return %c0_i32, %c0_i32_0 : i32, i32
  }
  func.func @transform_3(%arg0: i32) -> (i32, i32) {
    %c0_i32 = arith.constant 0 : i32
    %c0_i32_0 = arith.constant 0 : i32
    %c0_i32_1 = arith.constant 0 : i32
    return %c0_i32, %c0_i32_0 : i32, i32
  }
  func.func @transform_4(%arg0: i32) -> (i32, i32) {
    %c0_i32 = arith.constant 0 : i32
    %c0_i32_0 = arith.constant 0 : i32
    return %arg0, %c0_i32 : i32, i32
  }
}

module attributes {stable_mosaic.version = 11 : i64} {
  func.func @_fused_conv_kernel(%arg0: i32, %arg1: memref<128x400xbf16, #tpu.memory_space<vmem>>, %arg2: memref<400x128xbf16, #tpu.memory_space<vmem>>, %arg3: memref<1x128xf32, #tpu.memory_space<vmem>>, %arg4: memref<1x128xf32, #tpu.memory_space<vmem>>, %arg5: memref<128x128xbf16, #tpu.memory_space<vmem>>) attributes {dimension_semantics = [#tpu.dimension_semantics<parallel>], iteration_bounds = array<i64: 1>, scalar_prefetch = 0 : i64, scratch_operands = 0 : i64, tpu.core_type = #tpu.core_type<tc>, window_params = [{transform_indices = @transform_0, window_bounds = array<i64: 128, 400>}, {pipeline_mode = #tpu.pipeline_mode<synchronous>, transform_indices = @transform_1, window_bounds = array<i64: 400, 128>}, {pipeline_mode = #tpu.pipeline_mode<synchronous>, transform_indices = @transform_2, window_bounds = array<i64: 1, 128>}, {pipeline_mode = #tpu.pipeline_mode<synchronous>, transform_indices = @transform_3, window_bounds = array<i64: 1, 128>}, {transform_indices = @transform_4, window_bounds = array<i64: 128, 128>}]} {
    %c0 = arith.constant 0 : index
    %c0_0 = arith.constant 0 : index
    %0 = vector.load %arg1[%c0, %c0_0] : memref<128x400xbf16, #tpu.memory_space<vmem>>, vector<128x400xbf16>
    %c0_1 = arith.constant 0 : index
    %c0_2 = arith.constant 0 : index
    %1 = vector.load %arg2[%c0_1, %c0_2] : memref<400x128xbf16, #tpu.memory_space<vmem>>, vector<400x128xbf16>
    %cst = arith.constant dense<0.000000e+00> : vector<128x128xf32>
    %2 = tpu.matmul %0, %1, %cst {dimension_numbers = #tpu.dot_dimension_numbers<[1], [0], [0], [1], [0, 0, 1, 1], [], []>} : vector<128x400xbf16>, vector<400x128xbf16>, vector<128x128xf32> -> vector<128x128xf32>
    %c0_3 = arith.constant 0 : index
    %c0_4 = arith.constant 0 : index
    %3 = vector.load %arg3[%c0_3, %c0_4] : memref<1x128xf32, #tpu.memory_space<vmem>>, vector<1x128xf32>
    %4 = vector.broadcast %3 : vector<1x128xf32> to vector<128x128xf32>
    %5 = arith.mulf %2, %4 : vector<128x128xf32>
    %c0_5 = arith.constant 0 : index
    %c0_6 = arith.constant 0 : index
    %6 = vector.load %arg4[%c0_5, %c0_6] : memref<1x128xf32, #tpu.memory_space<vmem>>, vector<1x128xf32>
    %7 = vector.broadcast %6 : vector<1x128xf32> to vector<128x128xf32>
    %8 = arith.addf %5, %7 : vector<128x128xf32>
    %cst_7 = arith.constant 0.000000e+00 : f32
    %9 = vector.broadcast %cst_7 : f32 to vector<128x128xf32>
    %10 = arith.cmpf ogt, %8, %9 : vector<128x128xf32>
    %cst_8 = arith.constant 5.000000e-02 : f32
    %11 = vector.broadcast %cst_8 : f32 to vector<128x128xf32>
    %12 = arith.mulf %11, %8 : vector<128x128xf32>
    %13 = arith.select %10, %8, %12 : vector<128x128xi1>, vector<128x128xf32>
    %14 = arith.truncf %13 : vector<128x128xf32> to vector<128x128xbf16>
    %c0_9 = arith.constant 0 : index
    %c0_10 = arith.constant 0 : index
    %15 = vector.load %arg5[%c0_9, %c0_10] : memref<128x128xbf16, #tpu.memory_space<vmem>>, vector<128x128xbf16>
    tpu.vector_store %arg5[%c0_9, %c0_10], %14 {strides = array<i32>} : memref<128x128xbf16, #tpu.memory_space<vmem>>, vector<128x128xbf16>,
    return
  }
  func.func @transform_0(%arg0: i32) -> (i32, i32) {
    %c0_i32 = arith.constant 0 : i32
    %c0_i32_0 = arith.constant 0 : i32
    return %arg0, %c0_i32 : i32, i32
  }
  func.func @transform_1(%arg0: i32) -> (i32, i32) {
    %c0_i32 = arith.constant 0 : i32
    %c0_i32_0 = arith.constant 0 : i32
    %c0_i32_1 = arith.constant 0 : i32
    return %c0_i32, %c0_i32_0 : i32, i32
  }
  func.func @transform_2(%arg0: i32) -> (i32, i32) {
    %c0_i32 = arith.constant 0 : i32
    %c0_i32_0 = arith.constant 0 : i32
    %c0_i32_1 = arith.constant 0 : i32
    return %c0_i32, %c0_i32_0 : i32, i32
  }
  func.func @transform_3(%arg0: i32) -> (i32, i32) {
    %c0_i32 = arith.constant 0 : i32
    %c0_i32_0 = arith.constant 0 : i32
    %c0_i32_1 = arith.constant 0 : i32
    return %c0_i32, %c0_i32_0 : i32, i32
  }
  func.func @transform_4(%arg0: i32) -> (i32, i32) {
    %c0_i32 = arith.constant 0 : i32
    %c0_i32_0 = arith.constant 0 : i32
    return %arg0, %c0_i32 : i32, i32
  }
}

module attributes {stable_mosaic.version = 11 : i64} {
  func.func @_tail_kernel(%arg0: i32, %arg1: memref<1x2x800xbf16, #tpu.memory_space<vmem>>, %arg2: memref<800x64xbf16, #tpu.memory_space<vmem>>, %arg3: memref<1x64xf32, #tpu.memory_space<vmem>>, %arg4: memref<1x64xf32, #tpu.memory_space<vmem>>, %arg5: memref<1x64x128xbf16, #tpu.memory_space<vmem>>, %arg6: memref<1x128xf32, #tpu.memory_space<vmem>>, %arg7: memref<1x128xf32, #tpu.memory_space<vmem>>, %arg8: memref<128x11xbf16, #tpu.memory_space<vmem>>, %arg9: memref<1x11xf32, #tpu.memory_space<vmem>>, %arg10: memref<2x11xf32, #tpu.memory_space<vmem>>, %arg11: memref<2x128xf32, #tpu.memory_space<vmem>>) attributes {dimension_semantics = [#tpu.dimension_semantics<arbitrary>], iteration_bounds = array<i64: 16>, scalar_prefetch = 0 : i64, scratch_operands = 1 : i64, tpu.core_type = #tpu.core_type<tc>, window_params = [{transform_indices = @transform_0, window_bounds = array<i64: 1, 2, 800>}, {pipeline_mode = #tpu.pipeline_mode<synchronous>, transform_indices = @transform_1, window_bounds = array<i64: 800, 64>}, {pipeline_mode = #tpu.pipeline_mode<synchronous>, transform_indices = @transform_2, window_bounds = array<i64: 1, 64>}, {pipeline_mode = #tpu.pipeline_mode<synchronous>, transform_indices = @transform_3, window_bounds = array<i64: 1, 64>}, {transform_indices = @transform_4, window_bounds = array<i64: 1, 64, 128>}, {pipeline_mode = #tpu.pipeline_mode<synchronous>, transform_indices = @transform_5, window_bounds = array<i64: 1, 128>}, {pipeline_mode = #tpu.pipeline_mode<synchronous>, transform_indices = @transform_6, window_bounds = array<i64: 1, 128>}, {pipeline_mode = #tpu.pipeline_mode<synchronous>, transform_indices = @transform_7, window_bounds = array<i64: 128, 11>}, {pipeline_mode = #tpu.pipeline_mode<synchronous>, transform_indices = @transform_8, window_bounds = array<i64: 1, 11>}, {pipeline_mode = #tpu.pipeline_mode<synchronous>, transform_indices = @transform_9, window_bounds = array<i64: 2, 11>}]} {
    %c0_i32 = arith.constant 0 : i32
    %0 = arith.cmpi eq, %arg0, %c0_i32 : i32
    %1 = arith.extui %0 : i1 to i32
    %c0_i32_0 = arith.constant 0 : i32
    %2 = arith.cmpi ne, %1, %c0_i32_0 : i32
    scf.if %2 {
      %cst_20 = arith.constant 0.000000e+00 : f32
      %28 = vector.broadcast %cst_20 : f32 to vector<2x128xf32>
      %c0_21 = arith.constant 0 : index
      %c0_22 = arith.constant 0 : index
      %29 = vector.load %arg11[%c0_21, %c0_22] : memref<2x128xf32, #tpu.memory_space<vmem>>, vector<2x128xf32>
      tpu.vector_store %arg11[%c0_21, %c0_22], %28 {strides = array<i32>} : memref<2x128xf32, #tpu.memory_space<vmem>>, vector<2x128xf32>,
    } else {
    }
    %c0 = arith.constant 0 : index
    %c0_1 = arith.constant 0 : index
    %c0_2 = arith.constant 0 : index
    %3 = vector.load %arg1[%c0, %c0_1, %c0_2] : memref<1x2x800xbf16, #tpu.memory_space<vmem>>, vector<1x2x800xbf16>
    %4 = vector.shape_cast %3 : vector<1x2x800xbf16> to vector<2x800xbf16>
    %c0_3 = arith.constant 0 : index
    %c0_4 = arith.constant 0 : index
    %5 = vector.load %arg2[%c0_3, %c0_4] : memref<800x64xbf16, #tpu.memory_space<vmem>>, vector<800x64xbf16>
    %cst = arith.constant dense<0.000000e+00> : vector<2x64xf32>
    %6 = tpu.matmul %4, %5, %cst {dimension_numbers = #tpu.dot_dimension_numbers<[1], [0], [0], [1], [0, 0, 1, 1], [], []>} : vector<2x800xbf16>, vector<800x64xbf16>, vector<2x64xf32> -> vector<2x64xf32>
    %c0_5 = arith.constant 0 : index
    %c0_6 = arith.constant 0 : index
    %7 = vector.load %arg3[%c0_5, %c0_6] : memref<1x64xf32, #tpu.memory_space<vmem>>, vector<1x64xf32>
    %8 = vector.broadcast %7 : vector<1x64xf32> to vector<2x64xf32>
    %9 = arith.mulf %6, %8 : vector<2x64xf32>
    %c0_7 = arith.constant 0 : index
    %c0_8 = arith.constant 0 : index
    %10 = vector.load %arg4[%c0_7, %c0_8] : memref<1x64xf32, #tpu.memory_space<vmem>>, vector<1x64xf32>
    %11 = vector.broadcast %10 : vector<1x64xf32> to vector<2x64xf32>
    %12 = arith.addf %9, %11 : vector<2x64xf32>
    %cst_9 = arith.constant 0.000000e+00 : f32
    %13 = vector.broadcast %cst_9 : f32 to vector<2x64xf32>
    %14 = arith.cmpf ogt, %12, %13 : vector<2x64xf32>
    %cst_10 = arith.constant 5.000000e-02 : f32
    %15 = vector.broadcast %cst_10 : f32 to vector<2x64xf32>
    %16 = arith.mulf %15, %12 : vector<2x64xf32>
    %17 = arith.select %14, %12, %16 : vector<2x64xi1>, vector<2x64xf32>
    %c0_11 = arith.constant 0 : index
    %c0_12 = arith.constant 0 : index
    %18 = vector.load %arg11[%c0_11, %c0_12] : memref<2x128xf32, #tpu.memory_space<vmem>>, vector<2x128xf32>
    %19 = arith.truncf %17 : vector<2x64xf32> to vector<2x64xbf16>
    %c0_13 = arith.constant 0 : index
    %c0_14 = arith.constant 0 : index
    %c0_15 = arith.constant 0 : index
    %20 = vector.load %arg5[%c0_13, %c0_14, %c0_15] : memref<1x64x128xbf16, #tpu.memory_space<vmem>>, vector<1x64x128xbf16>
    %21 = vector.shape_cast %20 : vector<1x64x128xbf16> to vector<64x128xbf16>
    %cst_16 = arith.constant dense<0.000000e+00> : vector<2x128xf32>
    %22 = tpu.matmul %19, %21, %cst_16 {dimension_numbers = #tpu.dot_dimension_numbers<[1], [0], [0], [1], [0, 0, 1, 1], [], []>} : vector<2x64xbf16>, vector<64x128xbf16>, vector<2x128xf32> -> vector<2x128xf32>
    %23 = arith.addf %18, %22 : vector<2x128xf32>
    %c0_17 = arith.constant 0 : index
    %c0_18 = arith.constant 0 : index
    %24 = vector.load %arg11[%c0_17, %c0_18] : memref<2x128xf32, #tpu.memory_space<vmem>>, vector<2x128xf32>
    tpu.vector_store %arg11[%c0_17, %c0_18], %23 {strides = array<i32>} : memref<2x128xf32, #tpu.memory_space<vmem>>, vector<2x128xf32>,
    %c15_i32 = arith.constant 15 : i32
    %25 = arith.cmpi eq, %arg0, %c15_i32 : i32
    %26 = arith.extui %25 : i1 to i32
    %c0_i32_19 = arith.constant 0 : i32
    %27 = arith.cmpi ne, %26, %c0_i32_19 : i32
    scf.if %27 {
      %c0_20 = arith.constant 0 : index
      %c0_21 = arith.constant 0 : index
      %28 = vector.load %arg11[%c0_20, %c0_21] : memref<2x128xf32, #tpu.memory_space<vmem>>, vector<2x128xf32>
      %c0_22 = arith.constant 0 : index
      %c0_23 = arith.constant 0 : index
      %29 = vector.load %arg6[%c0_22, %c0_23] : memref<1x128xf32, #tpu.memory_space<vmem>>, vector<1x128xf32>
      %30 = vector.broadcast %29 : vector<1x128xf32> to vector<2x128xf32>
      %31 = arith.mulf %28, %30 : vector<2x128xf32>
      %c0_24 = arith.constant 0 : index
      %c0_25 = arith.constant 0 : index
      %32 = vector.load %arg7[%c0_24, %c0_25] : memref<1x128xf32, #tpu.memory_space<vmem>>, vector<1x128xf32>
      %33 = vector.broadcast %32 : vector<1x128xf32> to vector<2x128xf32>
      %34 = arith.addf %31, %33 : vector<2x128xf32>
      %cst_26 = arith.constant 0.000000e+00 : f32
      %35 = vector.broadcast %cst_26 : f32 to vector<2x128xf32>
      %36 = arith.cmpf ogt, %34, %35 : vector<2x128xf32>
      %cst_27 = arith.constant 5.000000e-02 : f32
      %37 = vector.broadcast %cst_27 : f32 to vector<2x128xf32>
      %38 = arith.mulf %37, %34 : vector<2x128xf32>
      %39 = arith.select %36, %34, %38 : vector<2x128xi1>, vector<2x128xf32>
      %40 = arith.truncf %39 : vector<2x128xf32> to vector<2x128xbf16>
      %c0_28 = arith.constant 0 : index
      %c0_29 = arith.constant 0 : index
      %41 = vector.load %arg8[%c0_28, %c0_29] : memref<128x11xbf16, #tpu.memory_space<vmem>>, vector<128x11xbf16>
      %cst_30 = arith.constant dense<0.000000e+00> : vector<2x11xf32>
      %42 = tpu.matmul %40, %41, %cst_30 {dimension_numbers = #tpu.dot_dimension_numbers<[1], [0], [0], [1], [0, 0, 1, 1], [], []>} : vector<2x128xbf16>, vector<128x11xbf16>, vector<2x11xf32> -> vector<2x11xf32>
      %c0_31 = arith.constant 0 : index
      %c0_32 = arith.constant 0 : index
      %43 = vector.load %arg9[%c0_31, %c0_32] : memref<1x11xf32, #tpu.memory_space<vmem>>, vector<1x11xf32>
      %44 = vector.broadcast %43 : vector<1x11xf32> to vector<2x11xf32>
      %45 = arith.addf %42, %44 : vector<2x11xf32>
      %c0_33 = arith.constant 0 : index
      %c0_34 = arith.constant 0 : index
      %46 = vector.load %arg10[%c0_33, %c0_34] : memref<2x11xf32, #tpu.memory_space<vmem>>, vector<2x11xf32>
      tpu.vector_store %arg10[%c0_33, %c0_34], %45 {strides = array<i32>} : memref<2x11xf32, #tpu.memory_space<vmem>>, vector<2x11xf32>,
    } else {
    }
    return
  }
  func.func @transform_0(%arg0: i32) -> (i32, i32, i32) {
    %c0_i32 = arith.constant 0 : i32
    %c0_i32_0 = arith.constant 0 : i32
    %c0_i32_1 = arith.constant 0 : i32
    return %arg0, %c0_i32, %c0_i32_0 : i32, i32, i32
  }
  func.func @transform_1(%arg0: i32) -> (i32, i32) {
    %c0_i32 = arith.constant 0 : i32
    %c0_i32_0 = arith.constant 0 : i32
    %c0_i32_1 = arith.constant 0 : i32
    return %c0_i32, %c0_i32_0 : i32, i32
  }
  func.func @transform_2(%arg0: i32) -> (i32, i32) {
    %c0_i32 = arith.constant 0 : i32
    %c0_i32_0 = arith.constant 0 : i32
    %c0_i32_1 = arith.constant 0 : i32
    return %c0_i32, %c0_i32_0 : i32, i32
  }
  func.func @transform_3(%arg0: i32) -> (i32, i32) {
    %c0_i32 = arith.constant 0 : i32
    %c0_i32_0 = arith.constant 0 : i32
    %c0_i32_1 = arith.constant 0 : i32
    return %c0_i32, %c0_i32_0 : i32, i32
  }
  func.func @transform_4(%arg0: i32) -> (i32, i32, i32) {
    %c0_i32 = arith.constant 0 : i32
    %c0_i32_0 = arith.constant 0 : i32
    %c0_i32_1 = arith.constant 0 : i32
    return %arg0, %c0_i32, %c0_i32_0 : i32, i32, i32
  }
  func.func @transform_5(%arg0: i32) -> (i32, i32) {
    %c0_i32 = arith.constant 0 : i32
    %c0_i32_0 = arith.constant 0 : i32
    %c0_i32_1 = arith.constant 0 : i32
    return %c0_i32, %c0_i32_0 : i32, i32
  }
  func.func @transform_6(%arg0: i32) -> (i32, i32) {
    %c0_i32 = arith.constant 0 : i32
    %c0_i32_0 = arith.constant 0 : i32
    %c0_i32_1 = arith.constant 0 : i32
    return %c0_i32, %c0_i32_0 : i32, i32
  }
  func.func @transform_7(%arg0: i32) -> (i32, i32) {
    %c0_i32 = arith.constant 0 : i32
    %c0_i32_0 = arith.constant 0 : i32
    %c0_i32_1 = arith.constant 0 : i32
    return %c0_i32, %c0_i32_0 : i32, i32
  }
  func.func @transform_8(%arg0: i32) -> (i32, i32) {
    %c0_i32 = arith.constant 0 : i32
    %c0_i32_0 = arith.constant 0 : i32
    %c0_i32_1 = arith.constant 0 : i32
    return %c0_i32, %c0_i32_0 : i32, i32
  }
  func.func @transform_9(%arg0: i32) -> (i32, i32) {
    %c0_i32 = arith.constant 0 : i32
    %c0_i32_0 = arith.constant 0 : i32
    %c0_i32_1 = arith.constant 0 : i32
    return %c0_i32, %c0_i32_0 : i32, i32
  }
}

</mosaic_0001>

<llo_original>
// kernel: _lambda_.3
$region0: #{_lambda_.3}
  #allocation0 [shape = 'u32[]', space=smem, size = 0x4, offset = 0x4, fixed_abs, tag = 'smem constant byte address 0x4 - core index']
  #allocation1 [shape = 'u32[144,128]{1,0:T(1,128)}', space=vmem, size = 0x12000, scoped, tag = 'internal scratch']
  %s0 = inlined_call_operand.vmem [shape: bf16[512,75], index: 0, kind: input, shape index: {}]
  %s1 = inlined_call_operand.vmem [shape: bf16[75,128], index: 1, kind: input, shape index: {}]
  %s2 = inlined_call_operand.vmem [shape: f32[1,128], index: 2, kind: input, shape index: {}]
  %s3 = inlined_call_operand.vmem [shape: f32[1,128], index: 3, kind: input, shape index: {}]
  %s4 = inlined_call_operand.vmem [shape: bf16[512,128], index: 4, kind: output, shape index: {}]
  %s5 = sld [smem:[#allocation0]]
  $region49: #{_lambda_.3} parent=0
    _
  %s7 = ssub.s32 1, %s5
  %s8 = scalar_select 0, %s7, %s5
  loop: start=0, step=1, limit=4
  $region2: #{_lambda_.3} parent=0 // loop_pre_header
    _
  $region3: #{_lambda_.3} parent=0 // loop_header
    %s10 = sphi 0, %s14
    %p11 = scmp.ge.s32.totalorder %s10, 4
    %s20 = sphi 0, %s22
    %s23 = sphi 0, %s20
    %s24 = sphi 0, %s23
    %s40 = sphi 0, %s24
    %s44 = sphi 0, %s44
    %s46 = sphi 0, %s44
    %s47 = sphi 0, %s46
    %s61 = sphi 0, %s47
    %s65 = sphi 0, %s65
    %s67 = sphi 0, %s65
    %s68 = sphi 0, %s67
    %s82 = sphi 0, %s68
    %s86 = sphi 0, %s86
    %s88 = sphi 0, %s86
    %s89 = sphi 0, %s88
    %s103 = sphi 0, %s89
    %s109 = sphi 0, %s111
    %s112 = sphi 0, %s109
    %s113 = sphi 0, %s112
    %s129 = sphi 0, %s113
  $region4: #{_lambda_.3} parent=0 // loop_header_branch
    %13 = sbr.rel (%p11) target = $region8
  $region5: #{_lambda_.3} parent=0 // loop_body
    %s15 = ssub.s32 %s10, 1
    %s16 = ssub.s32 %s10, 2
    %s17 = sadd.s32 %s10, 1
    %s18 = ssub.s32 %s10, %s17
    %p19 = scmp.eq.s32.totalorder %s18, 0
    %s21 = sadd.s32 %s20, 1
    %s22 = scalar_select %p19, %s20, %s21
    %p25 = pneg %p19
    %p26 = scmp.eq.s32.totalorder %s10, 1
    %p27 = por %p25, %p26
    %p28 = scmp.ne.s32.totalorder %s20, %s23
    %p29 = scmp.eq.s32.totalorder %s10, 0
    %p30 = por %p28, %p29
    %p31 = scmp.ne.s32.totalorder %s20, %s23
    %p32 = scmp.eq.s32.totalorder %s15, 1
    %p33 = por %p31, %p32
    %p34 = scmp.ne.s32.totalorder %s23, %s24
    %p35 = scmp.eq.s32.totalorder %s15, 0
    %p36 = por %p34, %p35
    %p37 = scmp.ne.s32.totalorder %s23, %s24
    %p38 = scmp.eq.s32.totalorder %s16, 1
    %p39 = por %p37, %p38
    %p41 = scmp.ne.s32.totalorder %s24, %s40
    %p42 = scmp.eq.s32.totalorder %s16, 0
    %p43 = por %p41, %p42
    %s45 = sadd.s32 %s44, 1
    %p48 = scmp.eq.s32.totalorder %s10, 1
    %p49 = scmp.ne.s32.totalorder %s44, %s46
    %p50 = scmp.eq.s32.totalorder %s10, 0
    %p51 = por %p49, %p50
    %p52 = scmp.ne.s32.totalorder %s44, %s46
    %p53 = scmp.eq.s32.totalorder %s15, 1
    %p54 = por %p52, %p53
    %p55 = scmp.ne.s32.totalorder %s46, %s47
    %p56 = scmp.eq.s32.totalorder %s15, 0
    %p57 = por %p55, %p56
    %p58 = scmp.ne.s32.totalorder %s46, %s47
    %p59 = scmp.eq.s32.totalorder %s16, 1
    %p60 = por %p58, %p59
    %p62 = scmp.ne.s32.totalorder %s47, %s61
    %p63 = scmp.eq.s32.totalorder %s16, 0
    %p64 = por %p62, %p63
    %s66 = sadd.s32 %s65, 1
    %p69 = scmp.eq.s32.totalorder %s10, 1
    %p70 = scmp.ne.s32.totalorder %s65, %s67
    %p71 = scmp.eq.s32.totalorder %s10, 0
    %p72 = por %p70, %p71
    %p73 = scmp.ne.s32.totalorder %s65, %s67
    %p74 = scmp.eq.s32.totalorder %s15, 1
    %p75 = por %p73, %p74
    %p76 = scmp.ne.s32.totalorder %s67, %s68
    %p77 = scmp.eq.s32.totalorder %s15, 0
    %p78 = por %p76, %p77
    %p79 = scmp.ne.s32.totalorder %s67, %s68
    %p80 = scmp.eq.s32.totalorder %s16, 1
    %p81 = por %p79, %p80
    %p83 = scmp.ne.s32.totalorder %s68, %s82
    %p84 = scmp.eq.s32.totalorder %s16, 0
    %p85 = por %p83, %p84
    %s87 = sadd.s32 %s86, 1
    %p90 = scmp.eq.s32.totalorder %s10, 1
    %p91 = scmp.ne.s32.totalorder %s86, %s88
    %p92 = scmp.eq.s32.totalorder %s10, 0
    %p93 = por %p91, %p92
    %p94 = scmp.ne.s32.totalorder %s86, %s88
    %p95 = scmp.eq.s32.totalorder %s15, 1
    %p96 = por %p94, %p95
    %p97 = scmp.ne.s32.totalorder %s88, %s89
    %p98 = scmp.eq.s32.totalorder %s15, 0
    %p99 = por %p97, %p98
    %p100 = scmp.ne.s32.totalorder %s88, %s89
    %p101 = scmp.eq.s32.totalorder %s16, 1
    %p102 = por %p100, %p101
    %p104 = scmp.ne.s32.totalorder %s89, %s103
    %p105 = scmp.eq.s32.totalorder %s16, 0
    %p106 = por %p104, %p105
    %s107 = ssub.s32 %s10, %s17
    %p108 = scmp.eq.s32.totalorder %s107, 0
    %s110 = sadd.s32 %s109, 1
    %s111 = scalar_select %p108, %s109, %s110
    %p114 = pneg %p108
    %p115 = scmp.eq.s32.totalorder %s10, 1
    %p116 = por %p114, %p115
    %p117 = scmp.ne.s32.totalorder %s109, %s112
    %p118 = scmp.eq.s32.totalorder %s10, 0
    %p119 = por %p117, %p118
    %p120 = scmp.ne.s32.totalorder %s109, %s112
    %p121 = scmp.eq.s32.totalorder %s15, 1
    %p122 = por %p120, %p121
    %p123 = scmp.ne.s32.totalorder %s112, %s113
    %p124 = scmp.eq.s32.totalorder %s15, 0
    %p125 = por %p123, %p124
    %p126 = scmp.ne.s32.totalorder %s112, %s113
    %p127 = scmp.eq.s32.totalorder %s16, 1
    %p128 = por %p126, %p127
    %p130 = scmp.ne.s32.totalorder %s113, %s129
    %p131 = scmp.eq.s32.totalorder %s16, 0
    %p132 = por %p130, %p131
    %p133 = scmp.le.s32.totalorder 1, %s10
    %p134 = scmp.lt.s32.totalorder %s10, 3
    %p135 = pnand %p133, %p134
    %p136 = pneg %p135
    // Predicated region
    $region9: #{_lambda_.3} parent=5 // pred_check
      _
    $region10: #{_lambda_.3} parent=5 // pred_check_branch
      %138 = sbr.rel (%p135) target = $region12
    $region11: #{_lambda_.3} parent=5 // pred_region
      %s139 = ssub.s32 %s10, 1
      // Predicated region
      $region13: #{_lambda_.3} parent=11 // pred_check
        %p140 = pneg %p57
      $region14: #{_lambda_.3} parent=11 // pred_check_branch
        %142 = sbr.rel (%p140) target = $region16
      $region15: #{_lambda_.3} parent=11 // pred_region
        _
      $region16: #{_lambda_.3} parent=11 // pred_fallthru
        _
      // Predicated region
      $region17: #{_lambda_.3} parent=11 // pred_check
        %p143 = pneg %p78
      $region18: #{_lambda_.3} parent=11 // pred_check_branch
        %145 = sbr.rel (%p143) target = $region20
      $region19: #{_lambda_.3} parent=11 // pred_region
        _
      $region20: #{_lambda_.3} parent=11 // pred_fallthru
        _
      // Predicated region
      $region21: #{_lambda_.3} parent=11 // pred_check
        %p146 = pneg %p99
      $region22: #{_lambda_.3} parent=11 // pred_check_branch
        %148 = sbr.rel (%p146) target = $region24
      $region23: #{_lambda_.3} parent=11 // pred_region
        _
      $region24: #{_lambda_.3} parent=11 // pred_fallthru
        _
    $region12: #{_lambda_.3} parent=5 // pred_fallthru
      _
    %p149 = scmp.lt.s32.totalorder %s10, 2
    // Predicated region
    $region25: #{_lambda_.3} parent=5 // pred_check
      %p150 = pneg %p149
    $region26: #{_lambda_.3} parent=5 // pred_check_branch
      %152 = sbr.rel (%p150) target = $region28
    $region27: #{_lambda_.3} parent=5 // pred_region
      // Predicated region
      $region29: #{_lambda_.3} parent=27 // pred_check
        %p153 = pneg %p30
      $region30: #{_lambda_.3} parent=27 // pred_check_branch
        %155 = sbr.rel (%p153) target = $region32
      $region31: #{_lambda_.3} parent=27 // pred_region
        %s156 = smul.u32 32, %s10
        %p157 = scmp.lt.s32.totalorder %s156, 63
        %s158 = scalar_select %p157, %s156, 63
        %s159 = smul.addr %s158, 4
        %s160 = scalar_lea.vmem %s0, %s159
        %s161 = smul.u32 32, %s10
      $region32: #{_lambda_.3} parent=27 // pred_fallthru
        _
    $region28: #{_lambda_.3} parent=5 // pred_fallthru
      _
    %p162 = scmp.le.s32.totalorder 1, %s10
    %p163 = scmp.lt.s32.totalorder %s10, 3
    %p164 = pnand %p162, %p163
    %p165 = pneg %p164
    // Predicated region
    $region33: #{_lambda_.3} parent=5 // pred_check
      _
    $region34: #{_lambda_.3} parent=5 // pred_check_branch
      %167 = sbr.rel (%p164) target = $region36
    $region35: #{_lambda_.3} parent=5 // pred_region
      %s168 = ssub.s32 %s10, 1
      %s169 = smul.u32 32, %s15
      %p170 = scmp.lt.s32.totalorder %s169, 63
      %s171 = scalar_select %p170, %s169, 63
      %s172 = smul.addr %s171, 4
      %s173 = scalar_lea.vmem %s0, %s172
      %p174 = pneg %p36
      %p175 = pneg %p33
      %p176 = pneg %p57
      %p177 = pneg %p54
      %p178 = pneg %p78
      %p179 = pneg %p75
      %p180 = pneg %p99
      %p181 = pneg %p96
      %p182 = pneg %p125
      %p183 = pneg %p122
      %s184 = smul.u32 32, %s15
      %p185 = scmp.lt.s32.totalorder %s184, 63
      %s186 = scalar_select %p185, %s184, 63
      %s187 = smul.addr %s186, 4
      %s188 = scalar_lea.vmem %s4, %s187
      %s189 = smul.u32 32, %s15
      %p190 = scmp.lt.s32.totalorder %s189, 63
      %s191 = scalar_select %p190, %s189, 63
      %s192 = smul.addr %s191, 4
      %s193 = scalar_lea.vmem %s0, %s192
      %s194 = smul.u32 32, %s15
      %s195 = smul.u32 32, %s15
      %p196 = scmp.lt.s32.totalorder %s195, 63
      %s197 = scalar_select %p196, %s195, 63
      %s198 = smul.addr %s197, 4
      %s199 = scalar_lea.vmem %s4, %s198
      %s200 = smul.u32 32, %s15
      %v202 = vld [vmem:[%s193] sm:$0xf]
      %v203 = vld [vmem:[%s193 + $0x4] sm:$0xf]
      %v204 = vld [vmem:[%s193 + $0x8] sm:$0xf]
      %v205 = vld [vmem:[%s193 + $0xc] sm:$0xf]
      %v206 = vld [vmem:[%s193 + $0x10] sm:$0xf]
      %v207 = vld [vmem:[%s193 + $0x14] sm:$0xf]
      %v208 = vld [vmem:[%s193 + $0x18] sm:$0xf]
      %v209 = vld [vmem:[%s193 + $0x1c] sm:$0xf]
      %v210 = vld [vmem:[%s193 + $0x20] sm:$0xf]
      %v211 = vld [vmem:[%s193 + $0x24] sm:$0xf]
      %v212 = vld [vmem:[%s193 + $0x28] sm:$0xf]
      %v213 = vld [vmem:[%s193 + $0x2c] sm:$0xf]
      %v214 = vld [vmem:[%s193 + $0x30] sm:$0xf]
      %v215 = vld [vmem:[%s193 + $0x34] sm:$0xf]
      %v216 = vld [vmem:[%s193 + $0x38] sm:$0xf]
      %v217 = vld [vmem:[%s193 + $0x3c] sm:$0xf]
      %v218 = vld [vmem:[%s193 + $0x40] sm:$0xf]
      %v219 = vld [vmem:[%s193 + $0x44] sm:$0xf]
      %v220 = vld [vmem:[%s193 + $0x48] sm:$0xf]
      %v221 = vld [vmem:[%s193 + $0x4c] sm:$0xf]
      %v222 = vld [vmem:[%s193 + $0x50] sm:$0xf]
      %v223 = vld [vmem:[%s193 + $0x54] sm:$0xf]
      %v224 = vld [vmem:[%s193 + $0x58] sm:$0xf]
      %v225 = vld [vmem:[%s193 + $0x5c] sm:$0xf]
      %v226 = vld [vmem:[%s193 + $0x60] sm:$0xf]
      %v227 = vld [vmem:[%s193 + $0x64] sm:$0xf]
      %v228 = vld [vmem:[%s193 + $0x68] sm:$0xf]
      %v229 = vld [vmem:[%s193 + $0x6c] sm:$0xf]
      %v230 = vld [vmem:[%s193 + $0x70] sm:$0xf]
      %v231 = vld [vmem:[%s193 + $0x74] sm:$0xf]
      %v232 = vld [vmem:[%s193 + $0x78] sm:$0xf]
      %v233 = vld [vmem:[%s193 + $0x7c] sm:$0xf]
      %v234 = vld [vmem:[%s1] sm:$0xf]
      %v235 = vld [vmem:[%s1 + $0x4] sm:$0xf]
      %v236 = vld [vmem:[%s1 + $0x8] sm:$0xf]
      %v237 = vld [vmem:[%s1 + $0xc] sm:$0xf]
      %v238 = vld [vmem:[%s1 + $0x10] sm:$0xf]
      %v239 = vld [vmem:[%s1 + $0x14] sm:$0xf]
      %v240 = vld [vmem:[%s1 + $0x18] sm:$0xf]
      %v241 = vld [vmem:[%s1 + $0x1c] sm:$0xf]
      %v242 = vld [vmem:[%s1 + $0x20] sm:$0xf]
      %v243 = vld [vmem:[%s1 + $0x24] sm:$0x3]
      %v276 = vunpack.c.l.b16 %v202
      %v277 = vunpack.c.l.b16 %v203
      %v278 = vunpack.c.l.b16 %v204
      %v279 = vunpack.c.l.b16 %v205
      %v280 = vunpack.c.l.b16 %v206
      %v281 = vunpack.c.l.b16 %v207
      %v282 = vunpack.c.l.b16 %v208
      %v283 = vunpack.c.l.b16 %v209
      %v284 = vunpack.c.l.b16 %v210
      %v285 = vunpack.c.l.b16 %v211
      %v286 = vunpack.c.l.b16 %v212
      %v287 = vunpack.c.l.b16 %v213
      %v288 = vunpack.c.l.b16 %v214
      %v289 = vunpack.c.l.b16 %v215
      %v290 = vunpack.c.l.b16 %v216
      %v291 = vunpack.c.l.b16 %v217
      %v292 = vunpack.c.l.b16 %v218
      %v293 = vunpack.c.l.b16 %v219
      %v294 = vunpack.c.l.b16 %v220
      %v295 = vunpack.c.l.b16 %v221
      %v296 = vunpack.c.l.b16 %v222
      %v297 = vunpack.c.l.b16 %v223
      %v298 = vunpack.c.l.b16 %v224
      %v299 = vunpack.c.l.b16 %v225
      %v300 = vunpack.c.l.b16 %v226
      %v301 = vunpack.c.l.b16 %v227
      %v302 = vunpack.c.l.b16 %v228
      %v303 = vunpack.c.l.b16 %v229
      %v304 = vunpack.c.l.b16 %v230
      %v305 = vunpack.c.l.b16 %v231
      %v306 = vunpack.c.l.b16 %v232
      %v307 = vunpack.c.l.b16 %v233
      %v308 = vpack.c.b16 %v277, %v276
      %v309 = vpack.c.b16 %v279, %v278
      %v310 = vpack.c.b16 %v281, %v280
      %v311 = vpack.c.b16 %v283, %v282
      %v312 = vpack.c.b16 %v285, %v284
      %v313 = vpack.c.b16 %v287, %v286
      %v314 = vpack.c.b16 %v289, %v288
      %v315 = vpack.c.b16 %v291, %v290
      %v316 = vpack.c.b16 %v293, %v292
      %v317 = vpack.c.b16 %v295, %v294
      %v318 = vpack.c.b16 %v297, %v296
      %v319 = vpack.c.b16 %v299, %v298
      %v320 = vpack.c.b16 %v301, %v300
      %v321 = vpack.c.b16 %v303, %v302
      %v322 = vpack.c.b16 %v305, %v304
      %v323 = vpack.c.b16 %v307, %v306
      %v334 = vunpack.c.l.b16 %v234
      %v335 = vunpack.c.l.b16 %v235
      %v336 = vunpack.c.l.b16 %v236
      %v337 = vunpack.c.l.b16 %v237
      %v338 = vunpack.c.l.b16 %v238
      %v339 = vunpack.c.l.b16 %v239
      %v340 = vunpack.c.l.b16 %v240
      %v341 = vunpack.c.l.b16 %v241
      %v342 = vunpack.c.l.b16 %v242
      %v343 = vunpack.c.l.b16 %v243
      %v344 = vpack.c.b16 %v335, %v334
      %v345 = vpack.c.b16 %v337, %v336
      %v346 = vpack.c.b16 %v339, %v338
      %v347 = vpack.c.b16 %v341, %v340
      %v348 = vpack.c.b16 %v343, %v342
      %vm353 = vcmask 613376
      %v355 = vsel %vm353, %v308, 0
      %v358 = vsel %vm353, %v309, 0
      %v361 = vsel %vm353, %v310, 0
      %v364 = vsel %vm353, %v311, 0
      %v367 = vsel %vm353, %v312, 0
      %v370 = vsel %vm353, %v313, 0
      %v373 = vsel %vm353, %v314, 0
      %v376 = vsel %vm353, %v315, 0
      %v379 = vsel %vm353, %v316, 0
      %v382 = vsel %vm353, %v317, 0
      %v385 = vsel %vm353, %v318, 0
      %v388 = vsel %vm353, %v319, 0
      %v391 = vsel %vm353, %v320, 0
      %v394 = vsel %vm353, %v321, 0
      %v397 = vsel %vm353, %v322, 0
      %v400 = vsel %vm353, %v323, 0
      %vm402 = vcmask 1044480
      %vm403 = vcmask 1045504
      %v404 = vsel %vm402, 4294967295, 65535
      %v405 = vsel %vm403, %v404, 0
      %v407 = vand.u32 %v348, %v405
      %409 = vmatprep.subr.bf16.mxu0 0
      %410 = vmatpush1.bf16.msra.mxu0 0
      %411 = vmatprep.subr.bf16.mxu0 0
      %412 = vmatpush1.bf16.msra.mxu0 0
      %413 = vmatprep.subr.bf16.mxu0 0
      %414 = vmatpush1.bf16.msra.mxu0 0
      %415 = vmatprep.subr.bf16.mxu0 0
      %416 = vmatpush1.bf16.msra.mxu0 %v407
      %417 = vmatprep.subr.bf16.mxu0 0
      %418 = vmatpush1.bf16.msra.mxu0 %v347
      %419 = vmatprep.subr.bf16.mxu0 0
      %420 = vmatpush1.bf16.msra.mxu0 %v346
      %421 = vmatprep.subr.bf16.mxu0 0
      %422 = vmatpush1.bf16.msra.mxu0 %v345
      %423 = vmatprep.subr.bf16.mxu0 0
      %424 = vmatpush1.bf16.msra.mxu0 %v344
      %425 = vmatprep.subr.bf16.mxu0 0
      %426 = vmatpush2.bf16.msra.mxu0 0
      %427 = vmatprep.subr.bf16.mxu0 0
      %428 = vmatpush2.bf16.msra.mxu0 0
      %429 = vmatprep.subr.bf16.mxu0 0
      %430 = vmatpush2.bf16.msra.mxu0 0
      %431 = vmatprep.subr.bf16.mxu0 0
      %432 = vmatpush2.bf16.msra.mxu0 0
      %433 = vmatprep.subr.bf16.mxu0 0
      %434 = vmatpush2.bf16.msra.mxu0 0
      %435 = vmatprep.subr.bf16.mxu0 0
      %436 = vmatpush2.bf16.msra.mxu0 0
      %437 = vmatprep.subr.bf16.mxu0 0
      %438 = vmatpush2.bf16.msra.mxu0 0
      %439 = vmatprep.subr.bf16.mxu0 0
      %440 = vmatpush2.bf16.msra.mxu0 0
      %441 = vmatprep.mubr.bf16.mxu0 0
      %442 = vmatmul.mubr.bf16.gmra.mxu0 %v355
      %v443 = vpop.f32.mrf.mxu0
      %v444 = vadd.f32 0.0, %v443
      %v445 = vpop.f32.mrf.mxu0
      %v446 = vpop.f32.mrf.mxu0
      %v447 = vadd.f32 0.0, %v446
      %v448 = vpop.f32.mrf.mxu0
      %449 = vmatprep.mubr.bf16.mxu0 0
      %450 = vmatmul.mubr.bf16.gmra.mxu0 %v358
      %v451 = vpop.f32.mrf.mxu0
      %v452 = vadd.f32 0.0, %v451
      %v453 = vpop.f32.mrf.mxu0
      %v454 = vpop.f32.mrf.mxu0
      %v455 = vadd.f32 0.0, %v454
      %v456 = vpop.f32.mrf.mxu0
      %457 = vmatprep.mubr.bf16.mxu0 0
      %458 = vmatmul.mubr.bf16.gmra.mxu0 %v361
      %v459 = vpop.f32.mrf.mxu0
      %v460 = vadd.f32 0.0, %v459
      %v461 = vpop.f32.mrf.mxu0
      %v462 = vpop.f32.mrf.mxu0
      %v463 = vadd.f32 0.0, %v462
      %v464 = vpop.f32.mrf.mxu0
      %465 = vmatprep.mubr.bf16.mxu0 0
      %466 = vmatmul.mubr.bf16.gmra.mxu0 %v364
      %v467 = vpop.f32.mrf.mxu0
      %v468 = vadd.f32 0.0, %v467
      %v469 = vpop.f32.mrf.mxu0
      %v470 = vpop.f32.mrf.mxu0
      %v471 = vadd.f32 0.0, %v470
      %v472 = vpop.f32.mrf.mxu0
      %473 = vmatprep.mubr.bf16.mxu0 0
      %474 = vmatmul.mubr.bf16.gmra.mxu0 %v367
      %v475 = vpop.f32.mrf.mxu0
      %v476 = vadd.f32 0.0, %v475
      %v477 = vpop.f32.mrf.mxu0
      %v478 = vpop.f32.mrf.mxu0
      %v479 = vadd.f32 0.0, %v478
      %v480 = vpop.f32.mrf.mxu0
      %481 = vmatprep.mubr.bf16.mxu0 0
      %482 = vmatmul.mubr.bf16.gmra.mxu0 %v370
      %v483 = vpop.f32.mrf.mxu0
      %v484 = vadd.f32 0.0, %v483
      %v485 = vpop.f32.mrf.mxu0
      %v486 = vpop.f32.mrf.mxu0
      %v487 = vadd.f32 0.0, %v486
      %v488 = vpop.f32.mrf.mxu0
      %489 = vmatprep.mubr.bf16.mxu0 0
      %490 = vmatmul.mubr.bf16.gmra.mxu0 %v373
      %v491 = vpop.f32.mrf.mxu0
      %v492 = vadd.f32 0.0, %v491
      %v493 = vpop.f32.mrf.mxu0
      %v494 = vpop.f32.mrf.mxu0
      %v495 = vadd.f32 0.0, %v494
      %v496 = vpop.f32.mrf.mxu0
      %497 = vmatprep.mubr.bf16.mxu0 0
      %498 = vmatmul.mubr.bf16.gmra.mxu0 %v376
      %v499 = vpop.f32.mrf.mxu0
      %v500 = vadd.f32 0.0, %v499
      %v501 = vpop.f32.mrf.mxu0
      %v502 = vpop.f32.mrf.mxu0
      %v503 = vadd.f32 0.0, %v502
      %v504 = vpop.f32.mrf.mxu0
      %505 = vmatprep.mubr.bf16.mxu0 0
      %506 = vmatmul.mubr.bf16.gmra.mxu0 %v379
      %v507 = vpop.f32.mrf.mxu0
      %v508 = vadd.f32 0.0, %v507
      %v509 = vpop.f32.mrf.mxu0
      %v510 = vpop.f32.mrf.mxu0
      %v511 = vadd.f32 0.0, %v510
      %v512 = vpop.f32.mrf.mxu0
      %513 = vmatprep.mubr.bf16.mxu0 0
      %514 = vmatmul.mubr.bf16.gmra.mxu0 %v382
      %v515 = vpop.f32.mrf.mxu0
      %v516 = vadd.f32 0.0, %v515
      %v517 = vpop.f32.mrf.mxu0
      %v518 = vpop.f32.mrf.mxu0
      %v519 = vadd.f32 0.0, %v518
      %v520 = vpop.f32.mrf.mxu0
      %521 = vmatprep.mubr.bf16.mxu0 0
      %522 = vmatmul.mubr.bf16.gmra.mxu0 %v385
      %v523 = vpop.f32.mrf.mxu0
      %v524 = vadd.f32 0.0, %v523
      %v525 = vpop.f32.mrf.mxu0
      %v526 = vpop.f32.mrf.mxu0
      %v527 = vadd.f32 0.0, %v526
      %v528 = vpop.f32.mrf.mxu0
      %529 = vmatprep.mubr.bf16.mxu0 0
      %530 = vmatmul.mubr.bf16.gmra.mxu0 %v388
      %v531 = vpop.f32.mrf.mxu0
      %v532 = vadd.f32 0.0, %v531
      %v533 = vpop.f32.mrf.mxu0
      %v534 = vpop.f32.mrf.mxu0
      %v535 = vadd.f32 0.0, %v534
      %v536 = vpop.f32.mrf.mxu0
      %537 = vmatprep.mubr.bf16.mxu0 0
      %538 = vmatmul.mubr.bf16.gmra.mxu0 %v391
      %v539 = vpop.f32.mrf.mxu0
      %v540 = vadd.f32 0.0, %v539
      %v541 = vpop.f32.mrf.mxu0
      %v542 = vpop.f32.mrf.mxu0
      %v543 = vadd.f32 0.0, %v542
      %v544 = vpop.f32.mrf.mxu0
      %545 = vmatprep.mubr.bf16.mxu0 0
      %546 = vmatmul.mubr.bf16.gmra.mxu0 %v394
      %v547 = vpop.f32.mrf.mxu0
      %v548 = vadd.f32 0.0, %v547
      %v549 = vpop.f32.mrf.mxu0
      %v550 = vpop.f32.mrf.mxu0
      %v551 = vadd.f32 0.0, %v550
      %v552 = vpop.f32.mrf.mxu0
      %553 = vmatprep.mubr.bf16.mxu0 0
      %554 = vmatmul.mubr.bf16.gmra.mxu0 %v397
      %v555 = vpop.f32.mrf.mxu0
      %v556 = vadd.f32 0.0, %v555
      %v557 = vpop.f32.mrf.mxu0
      %v558 = vpop.f32.mrf.mxu0
      %v559 = vadd.f32 0.0, %v558
      %v560 = vpop.f32.mrf.mxu0
      %561 = vmatprep.mubr.bf16.mxu0 0
      %562 = vmatmul.mubr.bf16.gmra.mxu0 %v400
      %v563 = vpop.f32.mrf.mxu0
      %v564 = vadd.f32 0.0, %v563
      %v565 = vpop.f32.mrf.mxu0
      %v566 = vpop.f32.mrf.mxu0
      %v567 = vadd.f32 0.0, %v566
      %v568 = vpop.f32.mrf.mxu0
      %569 = vdwg.mxu0
      %v570 = vld [vmem:[%s2] sm:$0x1]
      %v572 = vlaneseq
      %v573 = vshrl.u32 %v572, 7
      %v574 = vsub.s32 0, %v573
      %v575 = vrot.slane %v570, %v574
      %v577 = vmul.f32 %v444, %v575
      %v578 = vmul.f32 %v447, %v575
      %v579 = vmul.f32 %v452, %v575
      %v580 = vmul.f32 %v455, %v575
      %v581 = vmul.f32 %v460, %v575
      %v582 = vmul.f32 %v463, %v575
      %v583 = vmul.f32 %v468, %v575
      %v584 = vmul.f32 %v471, %v575
      %v585 = vmul.f32 %v476, %v575
      %v586 = vmul.f32 %v479, %v575
      %v587 = vmul.f32 %v484, %v575
      %v588 = vmul.f32 %v487, %v575
      %v589 = vmul.f32 %v492, %v575
      %v590 = vmul.f32 %v495, %v575
      %v591 = vmul.f32 %v500, %v575
      %v592 = vmul.f32 %v503, %v575
      %v593 = vmul.f32 %v508, %v575
      %v594 = vmul.f32 %v511, %v575
      %v595 = vmul.f32 %v516, %v575
      %v596 = vmul.f32 %v519, %v575
      %v597 = vmul.f32 %v524, %v575
      %v598 = vmul.f32 %v527, %v575
      %v599 = vmul.f32 %v532, %v575
      %v600 = vmul.f32 %v535, %v575
      %v601 = vmul.f32 %v540, %v575
      %v602 = vmul.f32 %v543, %v575
      %v603 = vmul.f32 %v548, %v575
      %v604 = vmul.f32 %v551, %v575
      %v605 = vmul.f32 %v556, %v575
      %v606 = vmul.f32 %v559, %v575
      %v607 = vmul.f32 %v564, %v575
      %v608 = vmul.f32 %v567, %v575
      %v609 = vld [vmem:[%s3] sm:$0x1]
      %v611 = vlaneseq
      %v612 = vshrl.u32 %v611, 7
      %v613 = vsub.s32 0, %v612
      %v614 = vrot.slane %v609, %v613
      %v616 = vadd.f32 %v577, %v614
      %v617 = vadd.f32 %v578, %v614
      %v618 = vadd.f32 %v579, %v614
      %v619 = vadd.f32 %v580, %v614
      %v620 = vadd.f32 %v581, %v614
      %v621 = vadd.f32 %v582, %v614
      %v622 = vadd.f32 %v583, %v614
      %v623 = vadd.f32 %v584, %v614
      %v624 = vadd.f32 %v585, %v614
      %v625 = vadd.f32 %v586, %v614
      %v626 = vadd.f32 %v587, %v614
      %v627 = vadd.f32 %v588, %v614
      %v628 = vadd.f32 %v589, %v614
      %v629 = vadd.f32 %v590, %v614
      %v630 = vadd.f32 %v591, %v614
      %v631 = vadd.f32 %v592, %v614
      %v632 = vadd.f32 %v593, %v614
      %v633 = vadd.f32 %v594, %v614
      %v634 = vadd.f32 %v595, %v614
      %v635 = vadd.f32 %v596, %v614
      %v636 = vadd.f32 %v597, %v614
      %v637 = vadd.f32 %v598, %v614
      %v638 = vadd.f32 %v599, %v614
      %v639 = vadd.f32 %v600, %v614
      %v640 = vadd.f32 %v601, %v614
      %v641 = vadd.f32 %v602, %v614
      %v642 = vadd.f32 %v603, %v614
      %v643 = vadd.f32 %v604, %v614
      %v644 = vadd.f32 %v605, %v614
      %v645 = vadd.f32 %v606, %v614
      %v646 = vadd.f32 %v607, %v614
      %v647 = vadd.f32 %v608, %v614
      %vm648 = vcmp.gt.f32.partialorder %v616, 0.0
      %vm649 = vcmp.gt.f32.partialorder %v617, 0.0
      %vm650 = vcmp.gt.f32.partialorder %v618, 0.0
      %vm651 = vcmp.gt.f32.partialorder %v619, 0.0
      %vm652 = vcmp.gt.f32.partialorder %v620, 0.0
      %vm653 = vcmp.gt.f32.partialorder %v621, 0.0
      %vm654 = vcmp.gt.f32.partialorder %v622, 0.0
      %vm655 = vcmp.gt.f32.partialorder %v623, 0.0
      %vm656 = vcmp.gt.f32.partialorder %v624, 0.0
      %vm657 = vcmp.gt.f32.partialorder %v625, 0.0
      %vm658 = vcmp.gt.f32.partialorder %v626, 0.0
      %vm659 = vcmp.gt.f32.partialorder %v627, 0.0
      %vm660 = vcmp.gt.f32.partialorder %v628, 0.0
      %vm661 = vcmp.gt.f32.partialorder %v629, 0.0
      %vm662 = vcmp.gt.f32.partialorder %v630, 0.0
      %vm663 = vcmp.gt.f32.partialorder %v631, 0.0
      %vm664 = vcmp.gt.f32.partialorder %v632, 0.0
      %vm665 = vcmp.gt.f32.partialorder %v633, 0.0
      %vm666 = vcmp.gt.f32.partialorder %v634, 0.0
      %vm667 = vcmp.gt.f32.partialorder %v635, 0.0
      %vm668 = vcmp.gt.f32.partialorder %v636, 0.0
      %vm669 = vcmp.gt.f32.partialorder %v637, 0.0
      %vm670 = vcmp.gt.f32.partialorder %v638, 0.0
      %vm671 = vcmp.gt.f32.partialorder %v639, 0.0
      %vm672 = vcmp.gt.f32.partialorder %v640, 0.0
      %vm673 = vcmp.gt.f32.partialorder %v641, 0.0
      %vm674 = vcmp.gt.f32.partialorder %v642, 0.0
      %vm675 = vcmp.gt.f32.partialorder %v643, 0.0
      %vm676 = vcmp.gt.f32.partialorder %v644, 0.0
      %vm677 = vcmp.gt.f32.partialorder %v645, 0.0
      %vm678 = vcmp.gt.f32.partialorder %v646, 0.0
      %vm679 = vcmp.gt.f32.partialorder %v647, 0.0
      %v680 = vmul.f32 %v616, 0.05
      %v681 = vmul.f32 %v617, 0.05
      %v682 = vmul.f32 %v618, 0.05
      %v683 = vmul.f32 %v619, 0.05
      %v684 = vmul.f32 %v620, 0.05
      %v685 = vmul.f32 %v621, 0.05
      %v686 = vmul.f32 %v622, 0.05
      %v687 = vmul.f32 %v623, 0.05
      %v688 = vmul.f32 %v624, 0.05
      %v689 = vmul.f32 %v625, 0.05
      %v690 = vmul.f32 %v626, 0.05
      %v691 = vmul.f32 %v627, 0.05
      %v692 = vmul.f32 %v628, 0.05
      %v693 = vmul.f32 %v629, 0.05
      %v694 = vmul.f32 %v630, 0.05
      %v695 = vmul.f32 %v631, 0.05
      %v696 = vmul.f32 %v632, 0.05
      %v697 = vmul.f32 %v633, 0.05
      %v698 = vmul.f32 %v634, 0.05
      %v699 = vmul.f32 %v635, 0.05
      %v700 = vmul.f32 %v636, 0.05
      %v701 = vmul.f32 %v637, 0.05
      %v702 = vmul.f32 %v638, 0.05
      %v703 = vmul.f32 %v639, 0.05
      %v704 = vmul.f32 %v640, 0.05
      %v705 = vmul.f32 %v641, 0.05
      %v706 = vmul.f32 %v642, 0.05
      %v707 = vmul.f32 %v643, 0.05
      %v708 = vmul.f32 %v644, 0.05
      %v709 = vmul.f32 %v645, 0.05
      %v710 = vmul.f32 %v646, 0.05
      %v711 = vmul.f32 %v647, 0.05
      %v712 = vsel %vm648, %v616, %v680
      %v713 = vsel %vm649, %v617, %v681
      %v714 = vsel %vm650, %v618, %v682
      %v715 = vsel %vm651, %v619, %v683
      %v716 = vsel %vm652, %v620, %v684
      %v717 = vsel %vm653, %v621, %v685
      %v718 = vsel %vm654, %v622, %v686
      %v719 = vsel %vm655, %v623, %v687
      %v720 = vsel %vm656, %v624, %v688
      %v721 = vsel %vm657, %v625, %v689
      %v722 = vsel %vm658, %v626, %v690
      %v723 = vsel %vm659, %v627, %v691
      %v724 = vsel %vm660, %v628, %v692
      %v725 = vsel %vm661, %v629, %v693
      %v726 = vsel %vm662, %v630, %v694
      %v727 = vsel %vm663, %v631, %v695
      %v728 = vsel %vm664, %v632, %v696
      %v729 = vsel %vm665, %v633, %v697
      %v730 = vsel %vm666, %v634, %v698
      %v731 = vsel %vm667, %v635, %v699
      %v732 = vsel %vm668, %v636, %v700
      %v733 = vsel %vm669, %v637, %v701
      %v734 = vsel %vm670, %v638, %v702
      %v735 = vsel %vm671, %v639, %v703
      %v736 = vsel %vm672, %v640, %v704
      %v737 = vsel %vm673, %v641, %v705
      %v738 = vsel %vm674, %v642, %v706
      %v739 = vsel %vm675, %v643, %v707
      %v740 = vsel %vm676, %v644, %v708
      %v741 = vsel %vm677, %v645, %v709
      %v742 = vsel %vm678, %v646, %v710
      %v743 = vsel %vm679, %v647, %v711
      %v744 = vpack.c.bf16 %v713, %v712
      %v745 = vpack.c.bf16 %v715, %v714
      %v746 = vpack.c.bf16 %v717, %v716
      %v747 = vpack.c.bf16 %v719, %v718
      %v748 = vpack.c.bf16 %v721, %v720
      %v749 = vpack.c.bf16 %v723, %v722
      %v750 = vpack.c.bf16 %v725, %v724
      %v751 = vpack.c.bf16 %v727, %v726
      %v752 = vpack.c.bf16 %v729, %v728
      %v753 = vpack.c.bf16 %v731, %v730
      %v754 = vpack.c.bf16 %v733, %v732
      %v755 = vpack.c.bf16 %v735, %v734
      %v756 = vpack.c.bf16 %v737, %v736
      %v757 = vpack.c.bf16 %v739, %v738
      %v758 = vpack.c.bf16 %v741, %v740
      %v759 = vpack.c.bf16 %v743, %v742
      %v776 = vunpack.c.l.b16 %v744
      %v777 = vunpack.c.h.b16 %v744
      %v778 = vunpack.c.l.b16 %v745
      %v779 = vunpack.c.h.b16 %v745
      %v780 = vunpack.c.l.b16 %v746
      %v781 = vunpack.c.h.b16 %v746
      %v782 = vunpack.c.l.b16 %v747
      %v783 = vunpack.c.h.b16 %v747
      %v784 = vunpack.c.l.b16 %v748
      %v785 = vunpack.c.h.b16 %v748
      %v786 = vunpack.c.l.b16 %v749
      %v787 = vunpack.c.h.b16 %v749
      %v788 = vunpack.c.l.b16 %v750
      %v789 = vunpack.c.h.b16 %v750
      %v790 = vunpack.c.l.b16 %v751
      %v791 = vunpack.c.h.b16 %v751
      %v792 = vunpack.c.l.b16 %v752
      %v793 = vunpack.c.h.b16 %v752
      %v794 = vunpack.c.l.b16 %v753
      %v795 = vunpack.c.h.b16 %v753
      %v796 = vunpack.c.l.b16 %v754
      %v797 = vunpack.c.h.b16 %v754
      %v798 = vunpack.c.l.b16 %v755
      %v799 = vunpack.c.h.b16 %v755
      %v800 = vunpack.c.l.b16 %v756
      %v801 = vunpack.c.h.b16 %v756
      %v802 = vunpack.c.l.b16 %v757
      %v803 = vunpack.c.h.b16 %v757
      %v804 = vunpack.c.l.b16 %v758
      %v805 = vunpack.c.h.b16 %v758
      %v806 = vunpack.c.l.b16 %v759
      %v807 = vunpack.c.h.b16 %v759
      %v808 = vpack.c.b16 %v776, %v776
      %v809 = vpack.c.b16 %v777, %v777
      %v810 = vpack.c.b16 %v778, %v778
      %v811 = vpack.c.b16 %v779, %v779
      %v812 = vpack.c.b16 %v780, %v780
      %v813 = vpack.c.b16 %v781, %v781
      %v814 = vpack.c.b16 %v782, %v782
      %v815 = vpack.c.b16 %v783, %v783
      %v816 = vpack.c.b16 %v784, %v784
      %v817 = vpack.c.b16 %v785, %v785
      %v818 = vpack.c.b16 %v786, %v786
      %v819 = vpack.c.b16 %v787, %v787
      %v820 = vpack.c.b16 %v788, %v788
      %v821 = vpack.c.b16 %v789, %v789
      %v822 = vpack.c.b16 %v790, %v790
      %v823 = vpack.c.b16 %v791, %v791
      %v824 = vpack.c.b16 %v792, %v792
      %v825 = vpack.c.b16 %v793, %v793
      %v826 = vpack.c.b16 %v794, %v794
      %v827 = vpack.c.b16 %v795, %v795
      %v828 = vpack.c.b16 %v796, %v796
      %v829 = vpack.c.b16 %v797, %v797
      %v830 = vpack.c.b16 %v798, %v798
      %v831 = vpack.c.b16 %v799, %v799
      %v832 = vpack.c.b16 %v800, %v800
      %v833 = vpack.c.b16 %v801, %v801
      %v834 = vpack.c.b16 %v802, %v802
      %v835 = vpack.c.b16 %v803, %v803
      %v836 = vpack.c.b16 %v804, %v804
      %v837 = vpack.c.b16 %v805, %v805
      %v838 = vpack.c.b16 %v806, %v806
      %v839 = vpack.c.b16 %v807, %v807
      %872 = vst [vmem:[%s199] sm:$0xf] %v808
      %873 = vst [vmem:[%s199 + $0x4] sm:$0xf] %v809
      %874 = vst [vmem:[%s199 + $0x8] sm:$0xf] %v810
      %875 = vst [vmem:[%s199 + $0xc] sm:$0xf] %v811
      %876 = vst [vmem:[%s199 + $0x10] sm:$0xf] %v812
      %877 = vst [vmem:[%s199 + $0x14] sm:$0xf] %v813
      %878 = vst [vmem:[%s199 + $0x18] sm:$0xf] %v814
      %879 = vst [vmem:[%s199 + $0x1c] sm:$0xf] %v815
      %880 = vst [vmem:[%s199 + $0x20] sm:$0xf] %v816
      %881 = vst [vmem:[%s199 + $0x24] sm:$0xf] %v817
      %882 = vst [vmem:[%s199 + $0x28] sm:$0xf] %v818
      %883 = vst [vmem:[%s199 + $0x2c] sm:$0xf] %v819
      %884 = vst [vmem:[%s199 + $0x30] sm:$0xf] %v820
      %885 = vst [vmem:[%s199 + $0x34] sm:$0xf] %v821
      %886 = vst [vmem:[%s199 + $0x38] sm:$0xf] %v822
      %887 = vst [vmem:[%s199 + $0x3c] sm:$0xf] %v823
      %888 = vst [vmem:[%s199 + $0x40] sm:$0xf] %v824
      %889 = vst [vmem:[%s199 + $0x44] sm:$0xf] %v825
      %890 = vst [vmem:[%s199 + $0x48] sm:$0xf] %v826
      %891 = vst [vmem:[%s199 + $0x4c] sm:$0xf] %v827
      %892 = vst [vmem:[%s199 + $0x50] sm:$0xf] %v828
      %893 = vst [vmem:[%s199 + $0x54] sm:$0xf] %v829
      %894 = vst [vmem:[%s199 + $0x58] sm:$0xf] %v830
      %895 = vst [vmem:[%s199 + $0x5c] sm:$0xf] %v831
      %896 = vst [vmem:[%s199 + $0x60] sm:$0xf] %v832
      %897 = vst [vmem:[%s199 + $0x64] sm:$0xf] %v833
      %898 = vst [vmem:[%s199 + $0x68] sm:$0xf] %v834
      %899 = vst [vmem:[%s199 + $0x6c] sm:$0xf] %v835
      %900 = vst [vmem:[%s199 + $0x70] sm:$0xf] %v836
      %901 = vst [vmem:[%s199 + $0x74] sm:$0xf] %v837
      %902 = vst [vmem:[%s199 + $0x78] sm:$0xf] %v838
      %903 = vst [vmem:[%s199 + $0x7c] sm:$0xf] %v839
      %s904 = smul.u32 32, %s15
      %p905 = scmp.lt.s32.totalorder %s904, 63
      %s906 = scalar_select %p905, %s904, 63
      %s907 = smul.addr %s906, 4
      %s908 = scalar_lea.vmem %s4, %s907
      // Predicated region
      $region37: #{_lambda_.3} parent=35 // pred_check
        %p909 = pneg %p122
      $region38: #{_lambda_.3} parent=35 // pred_check_branch
        %911 = sbr.rel (%p909) target = $region40
      $region39: #{_lambda_.3} parent=35 // pred_region
        %s912 = smul.u32 32, %s15
      $region40: #{_lambda_.3} parent=35 // pred_fallthru
        _
    $region36: #{_lambda_.3} parent=5 // pred_fallthru
      _
    %p913 = scmp.le.s32.totalorder 2, %s10
    // Predicated region
    $region41: #{_lambda_.3} parent=5 // pred_check
      %p914 = pneg %p913
    $region42: #{_lambda_.3} parent=5 // pred_check_branch
      %916 = sbr.rel (%p914) target = $region44
    $region43: #{_lambda_.3} parent=5 // pred_region
      %s917 = ssub.s32 %s10, 2
      // Predicated region
      $region45: #{_lambda_.3} parent=43 // pred_check
        %p918 = pneg %p128
      $region46: #{_lambda_.3} parent=43 // pred_check_branch
        %920 = sbr.rel (%p918) target = $region48
      $region47: #{_lambda_.3} parent=43 // pred_region
        %s921 = smul.u32 32, %s16
        %p922 = scmp.lt.s32.totalorder %s921, 63
        %s923 = scalar_select %p922, %s921, 63
        %s924 = smul.addr %s923, 4
        %s925 = scalar_lea.vmem %s4, %s924
      $region48: #{_lambda_.3} parent=43 // pred_fallthru
        _
    $region44: #{_lambda_.3} parent=5 // pred_fallthru
      _
  $region6: #{_lambda_.3} parent=0 // loop_footer
    %s14 = sadd.s32 1, %s10
  $region7: #{_lambda_.3} parent=0 // loop_footer_branch
    %9 = sbr.rel target = $region3
  $region8: #{_lambda_.3} parent=0 // loop_exit
    _

// kernel: _lambda_.4
$region0: #{_lambda_.4}
  #allocation0 [shape = 'u32[]', space=smem, size = 0x4, offset = 0x4, fixed_abs, tag = 'smem constant byte address 0x4 - core index']
  #allocation1 [shape = 'u32[144,128]{1,0:T(1,128)}', space=vmem, size = 0x12000, scoped, tag = 'internal scratch']
  %s0 = inlined_call_operand.vmem [shape: bf16[128,400], index: 0, kind: input, shape index: {}]
  %s1 = inlined_call_operand.vmem [shape: bf16[400,128], index: 1, kind: input, shape index: {}]
  %s2 = inlined_call_operand.vmem [shape: f32[1,128], index: 2, kind: input, shape index: {}]
  %s3 = inlined_call_operand.vmem [shape: f32[1,128], index: 3, kind: input, shape index: {}]
  %s4 = inlined_call_operand.vmem [shape: bf16[128,128], index: 4, kind: output, shape index: {}]
  %s5 = sld [smem:[#allocation0]]
  $region26: #{_lambda_.4} parent=0
    _
  %s7 = ssub.s32 1, %s5
  %s8 = scalar_select 0, %s7, %s5
  // Predicated region
  $region2: #{_lambda_.4} parent=0 // pred_check
    _
  $region3: #{_lambda_.4} parent=0 // pred_check_branch
    %10 = sbr.rel (0) target = $region5
  $region4: #{_lambda_.4} parent=0 // pred_region
    _
  $region5: #{_lambda_.4} parent=0 // pred_fallthru
    _
  // Predicated region
  $region6: #{_lambda_.4} parent=0 // pred_check
    _
  $region7: #{_lambda_.4} parent=0 // pred_check_branch
    %12 = sbr.rel (0) target = $region9
  $region8: #{_lambda_.4} parent=0 // pred_region
    _
  $region9: #{_lambda_.4} parent=0 // pred_fallthru
    _
  // Predicated region
  $region10: #{_lambda_.4} parent=0 // pred_check
    _
  $region11: #{_lambda_.4} parent=0 // pred_check_branch
    %14 = sbr.rel (0) target = $region13
  $region12: #{_lambda_.4} parent=0 // pred_region
    _
  $region13: #{_lambda_.4} parent=0 // pred_fallthru
    _
  // Predicated region
  $region14: #{_lambda_.4} parent=0 // pred_check
    _
  $region15: #{_lambda_.4} parent=0 // pred_check_branch
    %16 = sbr.rel (0) target = $region17
  $region16: #{_lambda_.4} parent=0 // pred_region
    _
  $region17: #{_lambda_.4} parent=0 // pred_fallthru
    _
  %v18 = vld [vmem:[%s0] sm:$0xff]
  %v19 = vld [vmem:[%s0 + $0x8] sm:$0xff]
  %v20 = vld [vmem:[%s0 + $0x10] sm:$0xff]
  %v21 = vld [vmem:[%s0 + $0x18] sm:$0xff]
  %v22 = vld [vmem:[%s0 + $0x20] sm:$0xff]
  %v23 = vld [vmem:[%s0 + $0x28] sm:$0xff]
  %v24 = vld [vmem:[%s0 + $0x30] sm:$0xff]
  %v25 = vld [vmem:[%s0 + $0x38] sm:$0xff]
  %v26 = vld [vmem:[%s0 + $0x40] sm:$0xff]
  %v27 = vld [vmem:[%s0 + $0x48] sm:$0xff]
  %v28 = vld [vmem:[%s0 + $0x50] sm:$0xff]
  %v29 = vld [vmem:[%s0 + $0x58] sm:$0xff]
  %v30 = vld [vmem:[%s0 + $0x60] sm:$0xff]
  %v31 = vld [vmem:[%s0 + $0x68] sm:$0xff]
  %v32 = vld [vmem:[%s0 + $0x70] sm:$0xff]
  %v33 = vld [vmem:[%s0 + $0x78] sm:$0xff]
  %v34 = vld [vmem:[%s0 + $0x80] sm:$0xff]
  %v35 = vld [vmem:[%s0 + $0x88] sm:$0xff]
  %v36 = vld [vmem:[%s0 + $0x90] sm:$0xff]
  %v37 = vld [vmem:[%s0 + $0x98] sm:$0xff]
  %v38 = vld [vmem:[%s0 + $0xa0] sm:$0xff]
  %v39 = vld [vmem:[%s0 + $0xa8] sm:$0xff]
  %v40 = vld [vmem:[%s0 + $0xb0] sm:$0xff]
  %v41 = vld [vmem:[%s0 + $0xb8] sm:$0xff]
  %v42 = vld [vmem:[%s0 + $0xc0] sm:$0xff]
  %v43 = vld [vmem:[%s0 + $0xc8] sm:$0xff]
  %v44 = vld [vmem:[%s0 + $0xd0] sm:$0xff]
  %v45 = vld [vmem:[%s0 + $0xd8] sm:$0xff]
  %v46 = vld [vmem:[%s0 + $0xe0] sm:$0xff]
  %v47 = vld [vmem:[%s0 + $0xe8] sm:$0xff]
  %v48 = vld [vmem:[%s0 + $0xf0] sm:$0xff]
  %v49 = vld [vmem:[%s0 + $0xf8] sm:$0xff]
  %v50 = vld [vmem:[%s1] sm:$0xf]
  %v51 = vld [vmem:[%s1 + $0x4] sm:$0xf]
  %v52 = vld [vmem:[%s1 + $0x8] sm:$0xf]
  %v53 = vld [vmem:[%s1 + $0xc] sm:$0xf]
  %v54 = vld [vmem:[%s1 + $0x10] sm:$0xf]
  %v55 = vld [vmem:[%s1 + $0x14] sm:$0xf]
  %v56 = vld [vmem:[%s1 + $0x18] sm:$0xf]
  %v57 = vld [vmem:[%s1 + $0x1c] sm:$0xf]
  %v58 = vld [vmem:[%s1 + $0x20] sm:$0xf]
  %v59 = vld [vmem:[%s1 + $0x24] sm:$0xf]
  %v60 = vld [vmem:[%s1 + $0x28] sm:$0xf]
  %v61 = vld [vmem:[%s1 + $0x2c] sm:$0xf]
  %v62 = vld [vmem:[%s1 + $0x30] sm:$0xf]
  %v63 = vld [vmem:[%s1 + $0x34] sm:$0xf]
  %v64 = vld [vmem:[%s1 + $0x38] sm:$0xf]
  %v65 = vld [vmem:[%s1 + $0x3c] sm:$0xf]
  %v66 = vld [vmem:[%s1 + $0x40] sm:$0xf]
  %v67 = vld [vmem:[%s1 + $0x44] sm:$0xf]
  %v68 = vld [vmem:[%s1 + $0x48] sm:$0xf]
  %v69 = vld [vmem:[%s1 + $0x4c] sm:$0xf]
  %v70 = vld [vmem:[%s1 + $0x50] sm:$0xf]
  %v71 = vld [vmem:[%s1 + $0x54] sm:$0xf]
  %v72 = vld [vmem:[%s1 + $0x58] sm:$0xf]
  %v73 = vld [vmem:[%s1 + $0x5c] sm:$0xf]
  %v74 = vld [vmem:[%s1 + $0x60] sm:$0xf]
  %v75 = vld [vmem:[%s1 + $0x64] sm:$0xf]
  %v76 = vld [vmem:[%s1 + $0x68] sm:$0xf]
  %v77 = vld [vmem:[%s1 + $0x6c] sm:$0xf]
  %v78 = vld [vmem:[%s1 + $0x70] sm:$0xf]
  %v79 = vld [vmem:[%s1 + $0x74] sm:$0xf]
  %v80 = vld [vmem:[%s1 + $0x78] sm:$0xf]
  %v81 = vld [vmem:[%s1 + $0x7c] sm:$0xf]
  %v82 = vld [vmem:[%s1 + $0x80] sm:$0xf]
  %v83 = vld [vmem:[%s1 + $0x84] sm:$0xf]
  %v84 = vld [vmem:[%s1 + $0x88] sm:$0xf]
  %v85 = vld [vmem:[%s1 + $0x8c] sm:$0xf]
  %v86 = vld [vmem:[%s1 + $0x90] sm:$0xf]
  %v87 = vld [vmem:[%s1 + $0x94] sm:$0xf]
  %v88 = vld [vmem:[%s1 + $0x98] sm:$0xf]
  %v89 = vld [vmem:[%s1 + $0x9c] sm:$0xf]
  %v90 = vld [vmem:[%s1 + $0xa0] sm:$0xf]
  %v91 = vld [vmem:[%s1 + $0xa4] sm:$0xf]
  %v92 = vld [vmem:[%s1 + $0xa8] sm:$0xf]
  %v93 = vld [vmem:[%s1 + $0xac] sm:$0xf]
  %v94 = vld [vmem:[%s1 + $0xb0] sm:$0xf]
  %v95 = vld [vmem:[%s1 + $0xb4] sm:$0xf]
  %v96 = vld [vmem:[%s1 + $0xb8] sm:$0xf]
  %v97 = vld [vmem:[%s1 + $0xbc] sm:$0xf]
  %v98 = vld [vmem:[%s1 + $0xc0] sm:$0xf]
  %v99 = vld [vmem:[%s1 + $0xc4] sm:$0xf]
  %v132 = vunpack.c.l.b16 %v18
  %v133 = vunpack.c.h.b16 %v18
  %v134 = vunpack.c.l.b16 %v19
  %v135 = vunpack.c.h.b16 %v19
  %v136 = vunpack.c.l.b16 %v20
  %v137 = vunpack.c.h.b16 %v20
  %v138 = vunpack.c.l.b16 %v21
  %v139 = vunpack.c.h.b16 %v21
  %v140 = vunpack.c.l.b16 %v22
  %v141 = vunpack.c.h.b16 %v22
  %v142 = vunpack.c.l.b16 %v23
  %v143 = vunpack.c.h.b16 %v23
  %v144 = vunpack.c.l.b16 %v24
  %v145 = vunpack.c.h.b16 %v24
  %v146 = vunpack.c.l.b16 %v25
  %v147 = vunpack.c.h.b16 %v25
  %v148 = vunpack.c.l.b16 %v26
  %v149 = vunpack.c.h.b16 %v26
  %v150 = vunpack.c.l.b16 %v27
  %v151 = vunpack.c.h.b16 %v27
  %v152 = vunpack.c.l.b16 %v28
  %v153 = vunpack.c.h.b16 %v28
  %v154 = vunpack.c.l.b16 %v29
  %v155 = vunpack.c.h.b16 %v29
  %v156 = vunpack.c.l.b16 %v30
  %v157 = vunpack.c.h.b16 %v30
  %v158 = vunpack.c.l.b16 %v31
  %v159 = vunpack.c.h.b16 %v31
  %v160 = vunpack.c.l.b16 %v32
  %v161 = vunpack.c.h.b16 %v32
  %v162 = vunpack.c.l.b16 %v33
  %v163 = vunpack.c.h.b16 %v33
  %v164 = vunpack.c.l.b16 %v34
  %v165 = vunpack.c.h.b16 %v34
  %v166 = vunpack.c.l.b16 %v35
  %v167 = vunpack.c.h.b16 %v35
  %v168 = vunpack.c.l.b16 %v36
  %v169 = vunpack.c.h.b16 %v36
  %v170 = vunpack.c.l.b16 %v37
  %v171 = vunpack.c.h.b16 %v37
  %v172 = vunpack.c.l.b16 %v38
  %v173 = vunpack.c.h.b16 %v38
  %v174 = vunpack.c.l.b16 %v39
  %v175 = vunpack.c.h.b16 %v39
  %v176 = vunpack.c.l.b16 %v40
  %v177 = vunpack.c.h.b16 %v40
  %v178 = vunpack.c.l.b16 %v41
  %v179 = vunpack.c.h.b16 %v41
  %v180 = vunpack.c.l.b16 %v42
  %v181 = vunpack.c.h.b16 %v42
  %v182 = vunpack.c.l.b16 %v43
  %v183 = vunpack.c.h.b16 %v43
  %v184 = vunpack.c.l.b16 %v44
  %v185 = vunpack.c.h.b16 %v44
  %v186 = vunpack.c.l.b16 %v45
  %v187 = vunpack.c.h.b16 %v45
  %v188 = vunpack.c.l.b16 %v46
  %v189 = vunpack.c.h.b16 %v46
  %v190 = vunpack.c.l.b16 %v47
  %v191 = vunpack.c.h.b16 %v47
  %v192 = vunpack.c.l.b16 %v48
  %v193 = vunpack.c.h.b16 %v48
  %v194 = vunpack.c.l.b16 %v49
  %v195 = vunpack.c.h.b16 %v49
  %v196 = vpack.c.b16 %v136, %v132
  %v197 = vpack.c.b16 %v137, %v133
  %v198 = vpack.c.b16 %v138, %v134
  %v199 = vpack.c.b16 %v139, %v135
  %v200 = vpack.c.b16 %v144, %v140
  %v201 = vpack.c.b16 %v145, %v141
  %v202 = vpack.c.b16 %v146, %v142
  %v203 = vpack.c.b16 %v147, %v143
  %v204 = vpack.c.b16 %v152, %v148
  %v205 = vpack.c.b16 %v153, %v149
  %v206 = vpack.c.b16 %v154, %v150
  %v207 = vpack.c.b16 %v155, %v151
  %v208 = vpack.c.b16 %v160, %v156
  %v209 = vpack.c.b16 %v161, %v157
  %v210 = vpack.c.b16 %v162, %v158
  %v211 = vpack.c.b16 %v163, %v159
  %v212 = vpack.c.b16 %v168, %v164
  %v213 = vpack.c.b16 %v169, %v165
  %v214 = vpack.c.b16 %v170, %v166
  %v215 = vpack.c.b16 %v171, %v167
  %v216 = vpack.c.b16 %v176, %v172
  %v217 = vpack.c.b16 %v177, %v173
  %v218 = vpack.c.b16 %v178, %v174
  %v219 = vpack.c.b16 %v179, %v175
  %v220 = vpack.c.b16 %v184, %v180
  %v221 = vpack.c.b16 %v185, %v181
  %v222 = vpack.c.b16 %v186, %v182
  %v223 = vpack.c.b16 %v187, %v183
  %v224 = vpack.c.b16 %v192, %v188
  %v225 = vpack.c.b16 %v193, %v189
  %v226 = vpack.c.b16 %v194, %v190
  %v227 = vpack.c.b16 %v195, %v191
  %v302 = vunpack.c.l.b16 %v50
  %v303 = vunpack.c.l.b16 %v51
  %v304 = vunpack.c.l.b16 %v52
  %v305 = vunpack.c.l.b16 %v53
  %v306 = vunpack.c.l.b16 %v54
  %v307 = vunpack.c.l.b16 %v55
  %v308 = vunpack.c.l.b16 %v56
  %v309 = vunpack.c.l.b16 %v57
  %v310 = vunpack.c.l.b16 %v58
  %v311 = vunpack.c.l.b16 %v59
  %v312 = vunpack.c.l.b16 %v60
  %v313 = vunpack.c.l.b16 %v61
  %v314 = vunpack.c.l.b16 %v62
  %v315 = vunpack.c.l.b16 %v63
  %v316 = vunpack.c.l.b16 %v64
  %v317 = vunpack.c.l.b16 %v65
  %v318 = vunpack.c.l.b16 %v66
  %v319 = vunpack.c.l.b16 %v67
  %v320 = vunpack.c.l.b16 %v68
  %v321 = vunpack.c.l.b16 %v69
  %v322 = vunpack.c.l.b16 %v70
  %v323 = vunpack.c.l.b16 %v71
  %v324 = vunpack.c.l.b16 %v72
  %v325 = vunpack.c.l.b16 %v73
  %v326 = vunpack.c.l.b16 %v74
  %v327 = vunpack.c.l.b16 %v75
  %v328 = vunpack.c.l.b16 %v76
  %v329 = vunpack.c.l.b16 %v77
  %v330 = vunpack.c.l.b16 %v78
  %v331 = vunpack.c.l.b16 %v79
  %v332 = vunpack.c.l.b16 %v80
  %v333 = vunpack.c.l.b16 %v81
  %v334 = vunpack.c.l.b16 %v82
  %v335 = vunpack.c.l.b16 %v83
  %v336 = vunpack.c.l.b16 %v84
  %v337 = vunpack.c.l.b16 %v85
  %v338 = vunpack.c.l.b16 %v86
  %v339 = vunpack.c.l.b16 %v87
  %v340 = vunpack.c.l.b16 %v88
  %v341 = vunpack.c.l.b16 %v89
  %v342 = vunpack.c.l.b16 %v90
  %v343 = vunpack.c.l.b16 %v91
  %v344 = vunpack.c.l.b16 %v92
  %v345 = vunpack.c.l.b16 %v93
  %v346 = vunpack.c.l.b16 %v94
  %v347 = vunpack.c.l.b16 %v95
  %v348 = vunpack.c.l.b16 %v96
  %v349 = vunpack.c.l.b16 %v97
  %v350 = vunpack.c.l.b16 %v98
  %v351 = vunpack.c.l.b16 %v99
  %v352 = vpack.c.b16 %v303, %v302
  %v353 = vpack.c.b16 %v305, %v304
  %v354 = vpack.c.b16 %v307, %v306
  %v355 = vpack.c.b16 %v309, %v308
  %v356 = vpack.c.b16 %v311, %v310
  %v357 = vpack.c.b16 %v313, %v312
  %v358 = vpack.c.b16 %v315, %v314
  %v359 = vpack.c.b16 %v317, %v316
  %v360 = vpack.c.b16 %v319, %v318
  %v361 = vpack.c.b16 %v321, %v320
  %v362 = vpack.c.b16 %v323, %v322
  %v363 = vpack.c.b16 %v325, %v324
  %v364 = vpack.c.b16 %v327, %v326
  %v365 = vpack.c.b16 %v329, %v328
  %v366 = vpack.c.b16 %v331, %v330
  %v367 = vpack.c.b16 %v333, %v332
  %v368 = vpack.c.b16 %v335, %v334
  %v369 = vpack.c.b16 %v337, %v336
  %v370 = vpack.c.b16 %v339, %v338
  %v371 = vpack.c.b16 %v341, %v340
  %v372 = vpack.c.b16 %v343, %v342
  %v373 = vpack.c.b16 %v345, %v344
  %v374 = vpack.c.b16 %v347, %v346
  %v375 = vpack.c.b16 %v349, %v348
  %v376 = vpack.c.b16 %v351, %v350
  %vm402 = vcmask 130048
  %v404 = vsel %vm402, %v199, 0
  %v407 = vsel %vm402, %v203, 0
  %v410 = vsel %vm402, %v207, 0
  %v413 = vsel %vm402, %v211, 0
  %v416 = vsel %vm402, %v215, 0
  %v419 = vsel %vm402, %v219, 0
  %v422 = vsel %vm402, %v223, 0
  %v425 = vsel %vm402, %v227, 0
  %427 = vmatprep.subr.bf16.mxu0 0
  %428 = vmatpush1.bf16.msra.mxu0 %v359
  %429 = vmatprep.subr.bf16.mxu0 0
  %430 = vmatpush1.bf16.msra.mxu0 %v358
  %431 = vmatprep.subr.bf16.mxu0 0
  %432 = vmatpush1.bf16.msra.mxu0 %v357
  %433 = vmatprep.subr.bf16.mxu0 0
  %434 = vmatpush1.bf16.msra.mxu0 %v356
  %435 = vmatprep.subr.bf16.mxu0 0
  %436 = vmatpush1.bf16.msra.mxu0 %v355
  %437 = vmatprep.subr.bf16.mxu0 0
  %438 = vmatpush1.bf16.msra.mxu0 %v354
  %439 = vmatprep.subr.bf16.mxu0 0
  %440 = vmatpush1.bf16.msra.mxu0 %v353
  %441 = vmatprep.subr.bf16.mxu0 0
  %442 = vmatpush1.bf16.msra.mxu0 %v352
  %443 = vmatprep.subr.bf16.mxu0 0
  %444 = vmatpush2.bf16.msra.mxu0 %v367
  %445 = vmatprep.subr.bf16.mxu0 0
  %446 = vmatpush2.bf16.msra.mxu0 %v366
  %447 = vmatprep.subr.bf16.mxu0 0
  %448 = vmatpush2.bf16.msra.mxu0 %v365
  %449 = vmatprep.subr.bf16.mxu0 0
  %450 = vmatpush2.bf16.msra.mxu0 %v364
  %451 = vmatprep.subr.bf16.mxu0 0
  %452 = vmatpush2.bf16.msra.mxu0 %v363
  %453 = vmatprep.subr.bf16.mxu0 0
  %454 = vmatpush2.bf16.msra.mxu0 %v362
  %455 = vmatprep.subr.bf16.mxu0 0
  %456 = vmatpush2.bf16.msra.mxu0 %v361
  %457 = vmatprep.subr.bf16.mxu0 0
  %458 = vmatpush2.bf16.msra.mxu0 %v360
  %459 = vmatprep.mubr.bf16.mxu0 %v197
  %460 = vmatmul.mubr.bf16.gmra.mxu0 %v196
  %v461 = vpop.f32.mrf.mxu0
  %v462 = vadd.f32 0.0, %v461
  %v463 = vpop.f32.mrf.mxu0
  %v464 = vpop.f32.mrf.mxu0
  %v465 = vadd.f32 0.0, %v464
  %v466 = vpop.f32.mrf.mxu0
  %467 = vmatprep.mubr.bf16.mxu0 %v201
  %468 = vmatmul.mubr.bf16.gmra.mxu0 %v200
  %v469 = vpop.f32.mrf.mxu0
  %v470 = vadd.f32 0.0, %v469
  %v471 = vpop.f32.mrf.mxu0
  %v472 = vpop.f32.mrf.mxu0
  %v473 = vadd.f32 0.0, %v472
  %v474 = vpop.f32.mrf.mxu0
  %475 = vmatprep.mubr.bf16.mxu0 %v205
  %476 = vmatmul.mubr.bf16.gmra.mxu0 %v204
  %v477 = vpop.f32.mrf.mxu0
  %v478 = vadd.f32 0.0, %v477
  %v479 = vpop.f32.mrf.mxu0
  %v480 = vpop.f32.mrf.mxu0
  %v481 = vadd.f32 0.0, %v480
  %v482 = vpop.f32.mrf.mxu0
  %483 = vmatprep.mubr.bf16.mxu0 %v209
  %484 = vmatmul.mubr.bf16.gmra.mxu0 %v208
  %v485 = vpop.f32.mrf.mxu0
  %v486 = vadd.f32 0.0, %v485
  %v487 = vpop.f32.mrf.mxu0
  %v488 = vpop.f32.mrf.mxu0
  %v489 = vadd.f32 0.0, %v488
  %v490 = vpop.f32.mrf.mxu0
  %491 = vmatprep.mubr.bf16.mxu0 %v213
  %492 = vmatmul.mubr.bf16.gmra.mxu0 %v212
  %v493 = vpop.f32.mrf.mxu0
  %v494 = vadd.f32 0.0, %v493
  %v495 = vpop.f32.mrf.mxu0
  %v496 = vpop.f32.mrf.mxu0
  %v497 = vadd.f32 0.0, %v496
  %v498 = vpop.f32.mrf.mxu0
  %499 = vmatprep.mubr.bf16.mxu0 %v217
  %500 = vmatmul.mubr.bf16.gmra.mxu0 %v216
  %v501 = vpop.f32.mrf.mxu0
  %v502 = vadd.f32 0.0, %v501
  %v503 = vpop.f32.mrf.mxu0
  %v504 = vpop.f32.mrf.mxu0
  %v505 = vadd.f32 0.0, %v504
  %v506 = vpop.f32.mrf.mxu0
  %507 = vmatprep.mubr.bf16.mxu0 %v221
  %508 = vmatmul.mubr.bf16.gmra.mxu0 %v220
  %v509 = vpop.f32.mrf.mxu0
  %v510 = vadd.f32 0.0, %v509
  %v511 = vpop.f32.mrf.mxu0
  %v512 = vpop.f32.mrf.mxu0
  %v513 = vadd.f32 0.0, %v512
  %v514 = vpop.f32.mrf.mxu0
  %515 = vmatprep.mubr.bf16.mxu0 %v225
  %516 = vmatmul.mubr.bf16.gmra.mxu0 %v224
  %v517 = vpop.f32.mrf.mxu0
  %v518 = vadd.f32 0.0, %v517
  %v519 = vpop.f32.mrf.mxu0
  %v520 = vpop.f32.mrf.mxu0
  %v521 = vadd.f32 0.0, %v520
  %v522 = vpop.f32.mrf.mxu0
  %523 = vdwg.mxu0
  %524 = vmatprep.subr.bf16.mxu0 0
  %525 = vmatpush1.bf16.msra.mxu0 %v375
  %526 = vmatprep.subr.bf16.mxu0 0
  %527 = vmatpush1.bf16.msra.mxu0 %v374
  %528 = vmatprep.subr.bf16.mxu0 0
  %529 = vmatpush1.bf16.msra.mxu0 %v373
  %530 = vmatprep.subr.bf16.mxu0 0
  %531 = vmatpush1.bf16.msra.mxu0 %v372
  %532 = vmatprep.subr.bf16.mxu0 0
  %533 = vmatpush1.bf16.msra.mxu0 %v371
  %534 = vmatprep.subr.bf16.mxu0 0
  %535 = vmatpush1.bf16.msra.mxu0 %v370
  %536 = vmatprep.subr.bf16.mxu0 0
  %537 = vmatpush1.bf16.msra.mxu0 %v369
  %538 = vmatprep.subr.bf16.mxu0 0
  %539 = vmatpush1.bf16.msra.mxu0 %v368
  %540 = vmatprep.subr.bf16.mxu0 0
  %541 = vmatpush2.bf16.msra.mxu0 0
  %542 = vmatprep.subr.bf16.mxu0 0
  %543 = vmatpush2.bf16.msra.mxu0 0
  %544 = vmatprep.subr.bf16.mxu0 0
  %545 = vmatpush2.bf16.msra.mxu0 0
  %546 = vmatprep.subr.bf16.mxu0 0
  %547 = vmatpush2.bf16.msra.mxu0 0
  %548 = vmatprep.subr.bf16.mxu0 0
  %549 = vmatpush2.bf16.msra.mxu0 0
  %550 = vmatprep.subr.bf16.mxu0 0
  %551 = vmatpush2.bf16.msra.mxu0 0
  %552 = vmatprep.subr.bf16.mxu0 0
  %553 = vmatpush2.bf16.msra.mxu0 0
  %554 = vmatprep.subr.bf16.mxu0 0
  %555 = vmatpush2.bf16.msra.mxu0 %v376
  %556 = vmatprep.mubr.bf16.mxu0 %v404
  %557 = vmatmul.mubr.bf16.gmra.mxu0 %v198
  %v558 = vpop.f32.mrf.mxu0
  %v559 = vadd.f32 %v462, %v558
  %v560 = vpop.f32.mrf.mxu0
  %v561 = vpop.f32.mrf.mxu0
  %v562 = vadd.f32 %v465, %v561
  %v563 = vpop.f32.mrf.mxu0
  %564 = vmatprep.mubr.bf16.mxu0 %v407
  %565 = vmatmul.mubr.bf16.gmra.mxu0 %v202
  %v566 = vpop.f32.mrf.mxu0
  %v567 = vadd.f32 %v470, %v566
  %v568 = vpop.f32.mrf.mxu0
  %v569 = vpop.f32.mrf.mxu0
  %v570 = vadd.f32 %v473, %v569
  %v571 = vpop.f32.mrf.mxu0
  %572 = vmatprep.mubr.bf16.mxu0 %v410
  %573 = vmatmul.mubr.bf16.gmra.mxu0 %v206
  %v574 = vpop.f32.mrf.mxu0
  %v575 = vadd.f32 %v478, %v574
  %v576 = vpop.f32.mrf.mxu0
  %v577 = vpop.f32.mrf.mxu0
  %v578 = vadd.f32 %v481, %v577
  %v579 = vpop.f32.mrf.mxu0
  %580 = vmatprep.mubr.bf16.mxu0 %v413
  %581 = vmatmul.mubr.bf16.gmra.mxu0 %v210
  %v582 = vpop.f32.mrf.mxu0
  %v583 = vadd.f32 %v486, %v582
  %v584 = vpop.f32.mrf.mxu0
  %v585 = vpop.f32.mrf.mxu0
  %v586 = vadd.f32 %v489, %v585
  %v587 = vpop.f32.mrf.mxu0
  %588 = vmatprep.mubr.bf16.mxu0 %v416
  %589 = vmatmul.mubr.bf16.gmra.mxu0 %v214
  %v590 = vpop.f32.mrf.mxu0
  %v591 = vadd.f32 %v494, %v590
  %v592 = vpop.f32.mrf.mxu0
  %v593 = vpop.f32.mrf.mxu0
  %v594 = vadd.f32 %v497, %v593
  %v595 = vpop.f32.mrf.mxu0
  %596 = vmatprep.mubr.bf16.mxu0 %v419
  %597 = vmatmul.mubr.bf16.gmra.mxu0 %v218
  %v598 = vpop.f32.mrf.mxu0
  %v599 = vadd.f32 %v502, %v598
  %v600 = vpop.f32.mrf.mxu0
  %v601 = vpop.f32.mrf.mxu0
  %v602 = vadd.f32 %v505, %v601
  %v603 = vpop.f32.mrf.mxu0
  %604 = vmatprep.mubr.bf16.mxu0 %v422
  %605 = vmatmul.mubr.bf16.gmra.mxu0 %v222
  %v606 = vpop.f32.mrf.mxu0
  %v607 = vadd.f32 %v510, %v606
  %v608 = vpop.f32.mrf.mxu0
  %v609 = vpop.f32.mrf.mxu0
  %v610 = vadd.f32 %v513, %v609
  %v611 = vpop.f32.mrf.mxu0
  %612 = vmatprep.mubr.bf16.mxu0 %v425
  %613 = vmatmul.mubr.bf16.gmra.mxu0 %v226
  %v614 = vpop.f32.mrf.mxu0
  %v615 = vadd.f32 %v518, %v614
  %v616 = vpop.f32.mrf.mxu0
  %v617 = vpop.f32.mrf.mxu0
  %v618 = vadd.f32 %v521, %v617
  %v619 = vpop.f32.mrf.mxu0
  %620 = vdwg.mxu0
  %v621 = vld [vmem:[%s2] sm:$0x1]
  %v623 = vlaneseq
  %v624 = vshrl.u32 %v623, 7
  %v625 = vsub.s32 0, %v624
  %v626 = vrot.slane %v621, %v625
  %v628 = vmul.f32 %v559, %v626
  %v629 = vmul.f32 %v562, %v626
  %v630 = vmul.f32 %v567, %v626
  %v631 = vmul.f32 %v570, %v626
  %v632 = vmul.f32 %v575, %v626
  %v633 = vmul.f32 %v578, %v626
  %v634 = vmul.f32 %v583, %v626
  %v635 = vmul.f32 %v586, %v626
  %v636 = vmul.f32 %v591, %v626
  %v637 = vmul.f32 %v594, %v626
  %v638 = vmul.f32 %v599, %v626
  %v639 = vmul.f32 %v602, %v626
  %v640 = vmul.f32 %v607, %v626
  %v641 = vmul.f32 %v610, %v626
  %v642 = vmul.f32 %v615, %v626
  %v643 = vmul.f32 %v618, %v626
  %v644 = vld [vmem:[%s3] sm:$0x1]
  %v646 = vlaneseq
  %v647 = vshrl.u32 %v646, 7
  %v648 = vsub.s32 0, %v647
  %v649 = vrot.slane %v644, %v648
  %v651 = vadd.f32 %v628, %v649
  %v652 = vadd.f32 %v629, %v649
  %v653 = vadd.f32 %v630, %v649
  %v654 = vadd.f32 %v631, %v649
  %v655 = vadd.f32 %v632, %v649
  %v656 = vadd.f32 %v633, %v649
  %v657 = vadd.f32 %v634, %v649
  %v658 = vadd.f32 %v635, %v649
  %v659 = vadd.f32 %v636, %v649
  %v660 = vadd.f32 %v637, %v649
  %v661 = vadd.f32 %v638, %v649
  %v662 = vadd.f32 %v639, %v649
  %v663 = vadd.f32 %v640, %v649
  %v664 = vadd.f32 %v641, %v649
  %v665 = vadd.f32 %v642, %v649
  %v666 = vadd.f32 %v643, %v649
  %vm667 = vcmp.gt.f32.partialorder %v651, 0.0
  %vm668 = vcmp.gt.f32.partialorder %v652, 0.0
  %vm669 = vcmp.gt.f32.partialorder %v653, 0.0
  %vm670 = vcmp.gt.f32.partialorder %v654, 0.0
  %vm671 = vcmp.gt.f32.partialorder %v655, 0.0
  %vm672 = vcmp.gt.f32.partialorder %v656, 0.0
  %vm673 = vcmp.gt.f32.partialorder %v657, 0.0
  %vm674 = vcmp.gt.f32.partialorder %v658, 0.0
  %vm675 = vcmp.gt.f32.partialorder %v659, 0.0
  %vm676 = vcmp.gt.f32.partialorder %v660, 0.0
  %vm677 = vcmp.gt.f32.partialorder %v661, 0.0
  %vm678 = vcmp.gt.f32.partialorder %v662, 0.0
  %vm679 = vcmp.gt.f32.partialorder %v663, 0.0
  %vm680 = vcmp.gt.f32.partialorder %v664, 0.0
  %vm681 = vcmp.gt.f32.partialorder %v665, 0.0
  %vm682 = vcmp.gt.f32.partialorder %v666, 0.0
  %v683 = vmul.f32 %v651, 0.05
  %v684 = vmul.f32 %v652, 0.05
  %v685 = vmul.f32 %v653, 0.05
  %v686 = vmul.f32 %v654, 0.05
  %v687 = vmul.f32 %v655, 0.05
  %v688 = vmul.f32 %v656, 0.05
  %v689 = vmul.f32 %v657, 0.05
  %v690 = vmul.f32 %v658, 0.05
  %v691 = vmul.f32 %v659, 0.05
  %v692 = vmul.f32 %v660, 0.05
  %v693 = vmul.f32 %v661, 0.05
  %v694 = vmul.f32 %v662, 0.05
  %v695 = vmul.f32 %v663, 0.05
  %v696 = vmul.f32 %v664, 0.05
  %v697 = vmul.f32 %v665, 0.05
  %v698 = vmul.f32 %v666, 0.05
  %v699 = vsel %vm667, %v651, %v683
  %v700 = vsel %vm668, %v652, %v684
  %v701 = vsel %vm669, %v653, %v685
  %v702 = vsel %vm670, %v654, %v686
  %v703 = vsel %vm671, %v655, %v687
  %v704 = vsel %vm672, %v656, %v688
  %v705 = vsel %vm673, %v657, %v689
  %v706 = vsel %vm674, %v658, %v690
  %v707 = vsel %vm675, %v659, %v691
  %v708 = vsel %vm676, %v660, %v692
  %v709 = vsel %vm677, %v661, %v693
  %v710 = vsel %vm678, %v662, %v694
  %v711 = vsel %vm679, %v663, %v695
  %v712 = vsel %vm680, %v664, %v696
  %v713 = vsel %vm681, %v665, %v697
  %v714 = vsel %vm682, %v666, %v698
  %v715 = vpack.c.bf16 %v700, %v699
  %v716 = vpack.c.bf16 %v702, %v701
  %v717 = vpack.c.bf16 %v704, %v703
  %v718 = vpack.c.bf16 %v706, %v705
  %v719 = vpack.c.bf16 %v708, %v707
  %v720 = vpack.c.bf16 %v710, %v709
  %v721 = vpack.c.bf16 %v712, %v711
  %v722 = vpack.c.bf16 %v714, %v713
  %v731 = vunpack.c.l.b16 %v715
  %v732 = vunpack.c.h.b16 %v715
  %v733 = vunpack.c.l.b16 %v716
  %v734 = vunpack.c.h.b16 %v716
  %v735 = vunpack.c.l.b16 %v717
  %v736 = vunpack.c.h.b16 %v717
  %v737 = vunpack.c.l.b16 %v718
  %v738 = vunpack.c.h.b16 %v718
  %v739 = vunpack.c.l.b16 %v719
  %v740 = vunpack.c.h.b16 %v719
  %v741 = vunpack.c.l.b16 %v720
  %v742 = vunpack.c.h.b16 %v720
  %v743 = vunpack.c.l.b16 %v721
  %v744 = vunpack.c.h.b16 %v721
  %v745 = vunpack.c.l.b16 %v722
  %v746 = vunpack.c.h.b16 %v722
  %v747 = vpack.c.b16 %v731, %v731
  %v748 = vpack.c.b16 %v732, %v732
  %v749 = vpack.c.b16 %v733, %v733
  %v750 = vpack.c.b16 %v734, %v734
  %v751 = vpack.c.b16 %v735, %v735
  %v752 = vpack.c.b16 %v736, %v736
  %v753 = vpack.c.b16 %v737, %v737
  %v754 = vpack.c.b16 %v738, %v738
  %v755 = vpack.c.b16 %v739, %v739
  %v756 = vpack.c.b16 %v740, %v740
  %v757 = vpack.c.b16 %v741, %v741
  %v758 = vpack.c.b16 %v742, %v742
  %v759 = vpack.c.b16 %v743, %v743
  %v760 = vpack.c.b16 %v744, %v744
  %v761 = vpack.c.b16 %v745, %v745
  %v762 = vpack.c.b16 %v746, %v746
  %779 = vst [vmem:[%s4] sm:$0xf] %v747
  %780 = vst [vmem:[%s4 + $0x4] sm:$0xf] %v748
  %781 = vst [vmem:[%s4 + $0x8] sm:$0xf] %v749
  %782 = vst [vmem:[%s4 + $0xc] sm:$0xf] %v750
  %783 = vst [vmem:[%s4 + $0x10] sm:$0xf] %v751
  %784 = vst [vmem:[%s4 + $0x14] sm:$0xf] %v752
  %785 = vst [vmem:[%s4 + $0x18] sm:$0xf] %v753
  %786 = vst [vmem:[%s4 + $0x1c] sm:$0xf] %v754
  %787 = vst [vmem:[%s4 + $0x20] sm:$0xf] %v755
  %788 = vst [vmem:[%s4 + $0x24] sm:$0xf] %v756
  %789 = vst [vmem:[%s4 + $0x28] sm:$0xf] %v757
  %790 = vst [vmem:[%s4 + $0x2c] sm:$0xf] %v758
  %791 = vst [vmem:[%s4 + $0x30] sm:$0xf] %v759
  %792 = vst [vmem:[%s4 + $0x34] sm:$0xf] %v760
  %793 = vst [vmem:[%s4 + $0x38] sm:$0xf] %v761
  %794 = vst [vmem:[%s4 + $0x3c] sm:$0xf] %v762
  // Predicated region
  $region18: #{_lambda_.4} parent=0 // pred_check
    _
  $region19: #{_lambda_.4} parent=0 // pred_check_branch
    %796 = sbr.rel (0) target = $region21
  $region20: #{_lambda_.4} parent=0 // pred_region
    _
  $region21: #{_lambda_.4} parent=0 // pred_fallthru
    _
  // Predicated region
  $region22: #{_lambda_.4} parent=0 // pred_check
    _
  $region23: #{_lambda_.4} parent=0 // pred_check_branch
    %798 = sbr.rel (0) target = $region25
  $region24: #{_lambda_.4} parent=0 // pred_region
    _
  $region25: #{_lambda_.4} parent=0 // pred_fallthru
    _

// kernel: _lambda_.5
$region0: #{_lambda_.5}
  #allocation0 [shape = 'u32[]', space=smem, size = 0x4, offset = 0x4, fixed_abs, tag = 'smem constant byte address 0x4 - core index']
  #allocation1 [shape = 'u32[144,128]{1,0:T(1,128)}', space=vmem, size = 0x12000, scoped, tag = 'internal scratch']
  #allocation2 [shape = 'f32[2,128]{1,0:T(2,128)}', space=vmem, size = 0x400, scoped, tag = 'scratch operand']
  %s0 = inlined_call_operand.vmem [shape: bf16[16,2,800], index: 0, kind: input, shape index: {}]
  %s1 = inlined_call_operand.vmem [shape: bf16[800,64], index: 1, kind: input, shape index: {}]
  %s2 = inlined_call_operand.vmem [shape: f32[1,64], index: 2, kind: input, shape index: {}]
  %s3 = inlined_call_operand.vmem [shape: f32[1,64], index: 3, kind: input, shape index: {}]
  %s4 = inlined_call_operand.vmem [shape: bf16[16,64,128], index: 4, kind: input, shape index: {}]
  %s5 = inlined_call_operand.vmem [shape: f32[1,128], index: 5, kind: input, shape index: {}]
  %s6 = inlined_call_operand.vmem [shape: f32[1,128], index: 6, kind: input, shape index: {}]
  %s7 = inlined_call_operand.vmem [shape: bf16[128,11], index: 7, kind: input, shape index: {}]
  %s8 = inlined_call_operand.vmem [shape: f32[1,11], index: 8, kind: input, shape index: {}]
  %s9 = inlined_call_operand.hbm [shape: f32[2,11], index: 9, kind: output, shape index: {}]
  %s10 = sld [smem:[#allocation0]]
  $region77: #{_lambda_.5} parent=0
    _
  %s12 = ssub.s32 1, %s10
  %s13 = scalar_select 0, %s12, %s10
  $region1: #{_lambda_.5} parent=0
    #allocation3 [shape = 'u8[1024]{0}', space=vmem, size = 0x400, scoped, tag = 'output window, operand 0, single buffered']
    #allocation4 [shape = 's32[2]{0}', space=sflag, size = 0x8, scoped, tag = 'scoped memory for _lambda_.5']
    %14 = vsyncpa [#allocation4], 0
    loop: start=0, step=1, limit=18
    $region2: #{_lambda_.5} parent=1 // loop_pre_header
      _
    $region3: #{_lambda_.5} parent=1 // loop_header
      %s16 = sphi 0, %s20
      %p17 = scmp.ge.s32.totalorder %s16, 18
      %s26 = sphi 0, %s28
      %s29 = sphi 0, %s26
      %s30 = sphi 0, %s29
      %s46 = sphi 0, %s30
      %s50 = sphi 0, %s50
      %s52 = sphi 0, %s50
      %s53 = sphi 0, %s52
      %s67 = sphi 0, %s53
      %s71 = sphi 0, %s71
      %s73 = sphi 0, %s71
      %s74 = sphi 0, %s73
      %s88 = sphi 0, %s74
      %s92 = sphi 0, %s92
      %s94 = sphi 0, %s92
      %s95 = sphi 0, %s94
      %s109 = sphi 0, %s95
      %s115 = sphi 0, %s117
      %s118 = sphi 0, %s115
      %s119 = sphi 0, %s118
      %s135 = sphi 0, %s119
      %s139 = sphi 0, %s139
      %s141 = sphi 0, %s139
      %s142 = sphi 0, %s141
      %s156 = sphi 0, %s142
      %s160 = sphi 0, %s160
      %s162 = sphi 0, %s160
      %s163 = sphi 0, %s162
      %s177 = sphi 0, %s163
      %s181 = sphi 0, %s181
      %s183 = sphi 0, %s181
      %s184 = sphi 0, %s183
      %s198 = sphi 0, %s184
      %s202 = sphi 0, %s202
      %s204 = sphi 0, %s202
      %s205 = sphi 0, %s204
      %s219 = sphi 0, %s205
      %s223 = sphi 0, %s223
      %s225 = sphi 0, %s223
      %s226 = sphi 0, %s225
      %s240 = sphi 0, %s226
    $region4: #{_lambda_.5} parent=1 // loop_header_branch
      %19 = sbr.rel (%p17) target = $region8
    $region5: #{_lambda_.5} parent=1 // loop_body
      %s21 = ssub.s32 %s16, 1
      %s22 = ssub.s32 %s16, 2
      %s23 = sadd.s32 %s16, 1
      %s24 = ssub.s32 %s16, %s23
      %p25 = scmp.eq.s32.totalorder %s24, 0
      %s27 = sadd.s32 %s26, 1
      %s28 = scalar_select %p25, %s26, %s27
      %p31 = pneg %p25
      %p32 = scmp.eq.s32.totalorder %s16, 15
      %p33 = por %p31, %p32
      %p34 = scmp.ne.s32.totalorder %s26, %s29
      %p35 = scmp.eq.s32.totalorder %s16, 0
      %p36 = por %p34, %p35
      %p37 = scmp.ne.s32.totalorder %s26, %s29
      %p38 = scmp.eq.s32.totalorder %s21, 15
      %p39 = por %p37, %p38
      %p40 = scmp.ne.s32.totalorder %s29, %s30
      %p41 = scmp.eq.s32.totalorder %s21, 0
      %p42 = por %p40, %p41
      %p43 = scmp.ne.s32.totalorder %s29, %s30
      %p44 = scmp.eq.s32.totalorder %s22, 15
      %p45 = por %p43, %p44
      %p47 = scmp.ne.s32.totalorder %s30, %s46
      %p48 = scmp.eq.s32.totalorder %s22, 0
      %p49 = por %p47, %p48
      %s51 = sadd.s32 %s50, 1
      %p54 = scmp.eq.s32.totalorder %s16, 15
      %p55 = scmp.ne.s32.totalorder %s50, %s52
      %p56 = scmp.eq.s32.totalorder %s16, 0
      %p57 = por %p55, %p56
      %p58 = scmp.ne.s32.totalorder %s50, %s52
      %p59 = scmp.eq.s32.totalorder %s21, 15
      %p60 = por %p58, %p59
      %p61 = scmp.ne.s32.totalorder %s52, %s53
      %p62 = scmp.eq.s32.totalorder %s21, 0
      %p63 = por %p61, %p62
      %p64 = scmp.ne.s32.totalorder %s52, %s53
      %p65 = scmp.eq.s32.totalorder %s22, 15
      %p66 = por %p64, %p65
      %p68 = scmp.ne.s32.totalorder %s53, %s67
      %p69 = scmp.eq.s32.totalorder %s22, 0
      %p70 = por %p68, %p69
      %s72 = sadd.s32 %s71, 1
      %p75 = scmp.eq.s32.totalorder %s16, 15
      %p76 = scmp.ne.s32.totalorder %s71, %s73
      %p77 = scmp.eq.s32.totalorder %s16, 0
      %p78 = por %p76, %p77
      %p79 = scmp.ne.s32.totalorder %s71, %s73
      %p80 = scmp.eq.s32.totalorder %s21, 15
      %p81 = por %p79, %p80
      %p82 = scmp.ne.s32.totalorder %s73, %s74
      %p83 = scmp.eq.s32.totalorder %s21, 0
      %p84 = por %p82, %p83
      %p85 = scmp.ne.s32.totalorder %s73, %s74
      %p86 = scmp.eq.s32.totalorder %s22, 15
      %p87 = por %p85, %p86
      %p89 = scmp.ne.s32.totalorder %s74, %s88
      %p90 = scmp.eq.s32.totalorder %s22, 0
      %p91 = por %p89, %p90
      %s93 = sadd.s32 %s92, 1
      %p96 = scmp.eq.s32.totalorder %s16, 15
      %p97 = scmp.ne.s32.totalorder %s92, %s94
      %p98 = scmp.eq.s32.totalorder %s16, 0
      %p99 = por %p97, %p98
      %p100 = scmp.ne.s32.totalorder %s92, %s94
      %p101 = scmp.eq.s32.totalorder %s21, 15
      %p102 = por %p100, %p101
      %p103 = scmp.ne.s32.totalorder %s94, %s95
      %p104 = scmp.eq.s32.totalorder %s21, 0
      %p105 = por %p103, %p104
      %p106 = scmp.ne.s32.totalorder %s94, %s95
      %p107 = scmp.eq.s32.totalorder %s22, 15
      %p108 = por %p106, %p107
      %p110 = scmp.ne.s32.totalorder %s95, %s109
      %p111 = scmp.eq.s32.totalorder %s22, 0
      %p112 = por %p110, %p111
      %s113 = ssub.s32 %s16, %s23
      %p114 = scmp.eq.s32.totalorder %s113, 0
      %s116 = sadd.s32 %s115, 1
      %s117 = scalar_select %p114, %s115, %s116
      %p120 = pneg %p114
      %p121 = scmp.eq.s32.totalorder %s16, 15
      %p122 = por %p120, %p121
      %p123 = scmp.ne.s32.totalorder %s115, %s118
      %p124 = scmp.eq.s32.totalorder %s16, 0
      %p125 = por %p123, %p124
      %p126 = scmp.ne.s32.totalorder %s115, %s118
      %p127 = scmp.eq.s32.totalorder %s21, 15
      %p128 = por %p126, %p127
      %p129 = scmp.ne.s32.totalorder %s118, %s119
      %p130 = scmp.eq.s32.totalorder %s21, 0
      %p131 = por %p129, %p130
      %p132 = scmp.ne.s32.totalorder %s118, %s119
      %p133 = scmp.eq.s32.totalorder %s22, 15
      %p134 = por %p132, %p133
      %p136 = scmp.ne.s32.totalorder %s119, %s135
      %p137 = scmp.eq.s32.totalorder %s22, 0
      %p138 = por %p136, %p137
      %s140 = sadd.s32 %s139, 1
      %p143 = scmp.eq.s32.totalorder %s16, 15
      %p144 = scmp.ne.s32.totalorder %s139, %s141
      %p145 = scmp.eq.s32.totalorder %s16, 0
      %p146 = por %p144, %p145
      %p147 = scmp.ne.s32.totalorder %s139, %s141
      %p148 = scmp.eq.s32.totalorder %s21, 15
      %p149 = por %p147, %p148
      %p150 = scmp.ne.s32.totalorder %s141, %s142
      %p151 = scmp.eq.s32.totalorder %s21, 0
      %p152 = por %p150, %p151
      %p153 = scmp.ne.s32.totalorder %s141, %s142
      %p154 = scmp.eq.s32.totalorder %s22, 15
      %p155 = por %p153, %p154
      %p157 = scmp.ne.s32.totalorder %s142, %s156
      %p158 = scmp.eq.s32.totalorder %s22, 0
      %p159 = por %p157, %p158
      %s161 = sadd.s32 %s160, 1
      %p164 = scmp.eq.s32.totalorder %s16, 15
      %p165 = scmp.ne.s32.totalorder %s160, %s162
      %p166 = scmp.eq.s32.totalorder %s16, 0
      %p167 = por %p165, %p166
      %p168 = scmp.ne.s32.totalorder %s160, %s162
      %p169 = scmp.eq.s32.totalorder %s21, 15
      %p170 = por %p168, %p169
      %p171 = scmp.ne.s32.totalorder %s162, %s163
      %p172 = scmp.eq.s32.totalorder %s21, 0
      %p173 = por %p171, %p172
      %p174 = scmp.ne.s32.totalorder %s162, %s163
      %p175 = scmp.eq.s32.totalorder %s22, 15
      %p176 = por %p174, %p175
      %p178 = scmp.ne.s32.totalorder %s163, %s177
      %p179 = scmp.eq.s32.totalorder %s22, 0
      %p180 = por %p178, %p179
      %s182 = sadd.s32 %s181, 1
      %p185 = scmp.eq.s32.totalorder %s16, 15
      %p186 = scmp.ne.s32.totalorder %s181, %s183
      %p187 = scmp.eq.s32.totalorder %s16, 0
      %p188 = por %p186, %p187
      %p189 = scmp.ne.s32.totalorder %s181, %s183
      %p190 = scmp.eq.s32.totalorder %s21, 15
      %p191 = por %p189, %p190
      %p192 = scmp.ne.s32.totalorder %s183, %s184
      %p193 = scmp.eq.s32.totalorder %s21, 0
      %p194 = por %p192, %p193
      %p195 = scmp.ne.s32.totalorder %s183, %s184
      %p196 = scmp.eq.s32.totalorder %s22, 15
      %p197 = por %p195, %p196
      %p199 = scmp.ne.s32.totalorder %s184, %s198
      %p200 = scmp.eq.s32.totalorder %s22, 0
      %p201 = por %p199, %p200
      %s203 = sadd.s32 %s202, 1
      %p206 = scmp.eq.s32.totalorder %s16, 15
      %p207 = scmp.ne.s32.totalorder %s202, %s204
      %p208 = scmp.eq.s32.totalorder %s16, 0
      %p209 = por %p207, %p208
      %p210 = scmp.ne.s32.totalorder %s202, %s204
      %p211 = scmp.eq.s32.totalorder %s21, 15
      %p212 = por %p210, %p211
      %p213 = scmp.ne.s32.totalorder %s204, %s205
      %p214 = scmp.eq.s32.totalorder %s21, 0
      %p215 = por %p213, %p214
      %p216 = scmp.ne.s32.totalorder %s204, %s205
      %p217 = scmp.eq.s32.totalorder %s22, 15
      %p218 = por %p216, %p217
      %p220 = scmp.ne.s32.totalorder %s205, %s219
      %p221 = scmp.eq.s32.totalorder %s22, 0
      %p222 = por %p220, %p221
      %s224 = sadd.s32 %s223, 1
      %p227 = scmp.eq.s32.totalorder %s16, 15
      %p228 = scmp.ne.s32.totalorder %s223, %s225
      %p229 = scmp.eq.s32.totalorder %s16, 0
      %p230 = por %p228, %p229
      %p231 = scmp.ne.s32.totalorder %s223, %s225
      %p232 = scmp.eq.s32.totalorder %s21, 15
      %p233 = por %p231, %p232
      %p234 = scmp.ne.s32.totalorder %s225, %s226
      %p235 = scmp.eq.s32.totalorder %s21, 0
      %p236 = por %p234, %p235
      %p237 = scmp.ne.s32.totalorder %s225, %s226
      %p238 = scmp.eq.s32.totalorder %s22, 15
      %p239 = por %p237, %p238
      %p241 = scmp.ne.s32.totalorder %s226, %s240
      %p242 = scmp.eq.s32.totalorder %s22, 0
      %p243 = por %p241, %p242
      %p244 = scmp.le.s32.totalorder 1, %s16
      %p245 = scmp.lt.s32.totalorder %s16, 17
      %p246 = pnand %p244, %p245
      %p247 = pneg %p246
      // Predicated region
      $region9: #{_lambda_.5} parent=5 // pred_check
        _
      $region10: #{_lambda_.5} parent=5 // pred_check_branch
        %249 = sbr.rel (%p246) target = $region12
      $region11: #{_lambda_.5} parent=5 // pred_region
        %s250 = ssub.s32 %s16, 1
        // Predicated region
        $region13: #{_lambda_.5} parent=11 // pred_check
          %p251 = pneg %p63
        $region14: #{_lambda_.5} parent=11 // pred_check_branch
          %253 = sbr.rel (%p251) target = $region16
        $region15: #{_lambda_.5} parent=11 // pred_region
          _
        $region16: #{_lambda_.5} parent=11 // pred_fallthru
          _
        // Predicated region
        $region17: #{_lambda_.5} parent=11 // pred_check
          %p254 = pneg %p84
        $region18: #{_lambda_.5} parent=11 // pred_check_branch
          %256 = sbr.rel (%p254) target = $region20
        $region19: #{_lambda_.5} parent=11 // pred_region
          _
        $region20: #{_lambda_.5} parent=11 // pred_fallthru
          _
        // Predicated region
        $region21: #{_lambda_.5} parent=11 // pred_check
          %p257 = pneg %p105
        $region22: #{_lambda_.5} parent=11 // pred_check_branch
          %259 = sbr.rel (%p257) target = $region24
        $region23: #{_lambda_.5} parent=11 // pred_region
          _
        $region24: #{_lambda_.5} parent=11 // pred_fallthru
          _
        // Predicated region
        $region25: #{_lambda_.5} parent=11 // pred_check
          %p260 = pneg %p152
        $region26: #{_lambda_.5} parent=11 // pred_check_branch
          %262 = sbr.rel (%p260) target = $region28
        $region27: #{_lambda_.5} parent=11 // pred_region
          _
        $region28: #{_lambda_.5} parent=11 // pred_fallthru
          _
        // Predicated region
        $region29: #{_lambda_.5} parent=11 // pred_check
          %p263 = pneg %p173
        $region30: #{_lambda_.5} parent=11 // pred_check_branch
          %265 = sbr.rel (%p263) target = $region32
        $region31: #{_lambda_.5} parent=11 // pred_region
          _
        $region32: #{_lambda_.5} parent=11 // pred_fallthru
          _
        // Predicated region
        $region33: #{_lambda_.5} parent=11 // pred_check
          %p266 = pneg %p194
        $region34: #{_lambda_.5} parent=11 // pred_check_branch
          %268 = sbr.rel (%p266) target = $region36
        $region35: #{_lambda_.5} parent=11 // pred_region
          _
        $region36: #{_lambda_.5} parent=11 // pred_fallthru
          _
        // Predicated region
        $region37: #{_lambda_.5} parent=11 // pred_check
          %p269 = pneg %p215
        $region38: #{_lambda_.5} parent=11 // pred_check_branch
          %271 = sbr.rel (%p269) target = $region40
        $region39: #{_lambda_.5} parent=11 // pred_region
          _
        $region40: #{_lambda_.5} parent=11 // pred_fallthru
          _
      $region12: #{_lambda_.5} parent=5 // pred_fallthru
        _
      %p272 = scmp.lt.s32.totalorder %s16, 16
      // Predicated region
      $region41: #{_lambda_.5} parent=5 // pred_check
        %p273 = pneg %p272
      $region42: #{_lambda_.5} parent=5 // pred_check_branch
        %275 = sbr.rel (%p273) target = $region44
      $region43: #{_lambda_.5} parent=5 // pred_region
        // Predicated region
        $region45: #{_lambda_.5} parent=43 // pred_check
          %p276 = pneg %p36
        $region46: #{_lambda_.5} parent=43 // pred_check_branch
          %278 = sbr.rel (%p276) target = $region48
        $region47: #{_lambda_.5} parent=43 // pred_region
          %p279 = scmp.lt.s32.totalorder %s16, 15
          %s280 = scalar_select %p279, %s16, 15
          %s281 = smul.addr %s280, 7
          %s282 = scalar_lea.vmem %s0, %s281
        $region48: #{_lambda_.5} parent=43 // pred_fallthru
          _
        // Predicated region
        $region49: #{_lambda_.5} parent=43 // pred_check
          %p283 = pneg %p125
        $region50: #{_lambda_.5} parent=43 // pred_check_branch
          %285 = sbr.rel (%p283) target = $region52
        $region51: #{_lambda_.5} parent=43 // pred_region
          %p286 = scmp.lt.s32.totalorder %s16, 15
          %s287 = scalar_select %p286, %s16, 15
          %s288 = smul.addr %s287, 8
          %s289 = smul.addr %s288, 4
          %s290 = scalar_lea.vmem %s4, %s289
        $region52: #{_lambda_.5} parent=43 // pred_fallthru
          _
      $region44: #{_lambda_.5} parent=5 // pred_fallthru
        _
      %p291 = scmp.le.s32.totalorder 1, %s16
      %p292 = scmp.lt.s32.totalorder %s16, 17
      %p293 = pnand %p291, %p292
      %p294 = pneg %p293
      // Predicated region
      $region53: #{_lambda_.5} parent=5 // pred_check
        _
      $region54: #{_lambda_.5} parent=5 // pred_check_branch
        %296 = sbr.rel (%p293) target = $region56
      $region55: #{_lambda_.5} parent=5 // pred_region
        %s297 = ssub.s32 %s16, 1
        %p298 = scmp.lt.s32.totalorder %s21, 15
        %s299 = scalar_select %p298, %s21, 15
        %s300 = smul.addr %s299, 7
        %s301 = scalar_lea.vmem %s0, %s300
        %p302 = pneg %p42
        %p303 = pneg %p39
        %p304 = pneg %p63
        %p305 = pneg %p60
        %p306 = pneg %p84
        %p307 = pneg %p81
        %p308 = pneg %p105
        %p309 = pneg %p102
        %p310 = scmp.lt.s32.totalorder %s21, 15
        %s311 = scalar_select %p310, %s21, 15
        %s312 = smul.addr %s311, 8
        %s313 = smul.addr %s312, 4
        %s314 = scalar_lea.vmem %s4, %s313
        %p315 = pneg %p131
        %p316 = pneg %p128
        %p317 = pneg %p152
        %p318 = pneg %p149
        %p319 = pneg %p173
        %p320 = pneg %p170
        %p321 = pneg %p194
        %p322 = pneg %p191
        %p323 = pneg %p215
        %p324 = pneg %p212
        %p325 = pneg %p236
        %p326 = pneg %p233
        %p327 = scmp.lt.s32.totalorder %s21, 15
        %s328 = scalar_select %p327, %s21, 15
        %s329 = smul.addr %s328, 7
        %s330 = scalar_lea.vmem %s0, %s329
        %p331 = scmp.lt.s32.totalorder %s21, 15
        %s332 = scalar_select %p331, %s21, 15
        %s333 = smul.addr %s332, 8
        %s334 = smul.addr %s333, 4
        %s335 = scalar_lea.vmem %s4, %s334
        %p337 = scmp.eq.s32.totalorder %s21, 0
        // Predicated region
        $region57: #{_lambda_.5} parent=55 // pred_check
          %p338 = pneg %p337
        $region58: #{_lambda_.5} parent=55 // pred_check_branch
          %340 = sbr.rel (%p338) target = $region60
        $region59: #{_lambda_.5} parent=55 // pred_region
          %341 = vst [vmem:[#allocation2] sm:$0x3] 0.0
        $region60: #{_lambda_.5} parent=55 // pred_fallthru
          _
        %v342 = vld [vmem:[%s330] sm:$0x7f]
        %v343 = vld [vmem:[%s1] sm:$0xf]
        %v344 = vld [vmem:[%s1 + $0x4] sm:$0xf]
        %v345 = vld [vmem:[%s1 + $0x8] sm:$0xf]
        %v346 = vld [vmem:[%s1 + $0xc] sm:$0xf]
        %v347 = vld [vmem:[%s1 + $0x10] sm:$0xf]
        %v348 = vld [vmem:[%s1 + $0x14] sm:$0xf]
        %v349 = vld [vmem:[%s1 + $0x18] sm:$0xf]
        %v350 = vld [vmem:[%s1 + $0x1c] sm:$0xf]
        %v351 = vld [vmem:[%s1 + $0x20] sm:$0xf]
        %v352 = vld [vmem:[%s1 + $0x24] sm:$0xf]
        %v353 = vld [vmem:[%s1 + $0x28] sm:$0xf]
        %v354 = vld [vmem:[%s1 + $0x2c] sm:$0xf]
        %v355 = vld [vmem:[%s1 + $0x30] sm:$0xf]
        %v356 = vld [vmem:[%s1 + $0x34] sm:$0xf]
        %v357 = vld [vmem:[%s1 + $0x38] sm:$0xf]
        %v358 = vld [vmem:[%s1 + $0x3c] sm:$0xf]
        %v359 = vld [vmem:[%s1 + $0x40] sm:$0xf]
        %v360 = vld [vmem:[%s1 + $0x44] sm:$0xf]
        %v361 = vld [vmem:[%s1 + $0x48] sm:$0xf]
        %v362 = vld [vmem:[%s1 + $0x4c] sm:$0xf]
        %v363 = vld [vmem:[%s1 + $0x50] sm:$0xf]
        %v364 = vld [vmem:[%s1 + $0x54] sm:$0xf]
        %v365 = vld [vmem:[%s1 + $0x58] sm:$0xf]
        %v366 = vld [vmem:[%s1 + $0x5c] sm:$0xf]
        %v367 = vld [vmem:[%s1 + $0x60] sm:$0xf]
        %v368 = vld [vmem:[%s1 + $0x64] sm:$0xf]
        %v369 = vld [vmem:[%s1 + $0x68] sm:$0xf]
        %v370 = vld [vmem:[%s1 + $0x6c] sm:$0xf]
        %v371 = vld [vmem:[%s1 + $0x70] sm:$0xf]
        %v372 = vld [vmem:[%s1 + $0x74] sm:$0xf]
        %v373 = vld [vmem:[%s1 + $0x78] sm:$0xf]
        %v374 = vld [vmem:[%s1 + $0x7c] sm:$0xf]
        %v375 = vld [vmem:[%s1 + $0x80] sm:$0xf]
        %v376 = vld [vmem:[%s1 + $0x84] sm:$0xf]
        %v377 = vld [vmem:[%s1 + $0x88] sm:$0xf]
        %v378 = vld [vmem:[%s1 + $0x8c] sm:$0xf]
        %v379 = vld [vmem:[%s1 + $0x90] sm:$0xf]
        %v380 = vld [vmem:[%s1 + $0x94] sm:$0xf]
        %v381 = vld [vmem:[%s1 + $0x98] sm:$0xf]
        %v382 = vld [vmem:[%s1 + $0x9c] sm:$0xf]
        %v383 = vld [vmem:[%s1 + $0xa0] sm:$0xf]
        %v384 = vld [vmem:[%s1 + $0xa4] sm:$0xf]
        %v385 = vld [vmem:[%s1 + $0xa8] sm:$0xf]
        %v386 = vld [vmem:[%s1 + $0xac] sm:$0xf]
        %v387 = vld [vmem:[%s1 + $0xb0] sm:$0xf]
        %v388 = vld [vmem:[%s1 + $0xb4] sm:$0xf]
        %v389 = vld [vmem:[%s1 + $0xb8] sm:$0xf]
        %v390 = vld [vmem:[%s1 + $0xbc] sm:$0xf]
        %v391 = vld [vmem:[%s1 + $0xc0] sm:$0xf]
        %v392 = vld [vmem:[%s1 + $0xc4] sm:$0xf]
        %v393 = vld [vmem:[%s1 + $0xc8] sm:$0xf]
        %v394 = vld [vmem:[%s1 + $0xcc] sm:$0xf]
        %v395 = vld [vmem:[%s1 + $0xd0] sm:$0xf]
        %v396 = vld [vmem:[%s1 + $0xd4] sm:$0xf]
        %v397 = vld [vmem:[%s1 + $0xd8] sm:$0xf]
        %v398 = vld [vmem:[%s1 + $0xdc] sm:$0xf]
        %v399 = vld [vmem:[%s1 + $0xe0] sm:$0xf]
        %v400 = vld [vmem:[%s1 + $0xe4] sm:$0xf]
        %v401 = vld [vmem:[%s1 + $0xe8] sm:$0xf]
        %v402 = vld [vmem:[%s1 + $0xec] sm:$0xf]
        %v403 = vld [vmem:[%s1 + $0xf0] sm:$0xf]
        %v404 = vld [vmem:[%s1 + $0xf4] sm:$0xf]
        %v405 = vld [vmem:[%s1 + $0xf8] sm:$0xf]
        %v406 = vld [vmem:[%s1 + $0xfc] sm:$0xf]
        %v407 = vld [vmem:[%s1 + $0x100] sm:$0xf]
        %v408 = vld [vmem:[%s1 + $0x104] sm:$0xf]
        %v409 = vld [vmem:[%s1 + $0x108] sm:$0xf]
        %v410 = vld [vmem:[%s1 + $0x10c] sm:$0xf]
        %v411 = vld [vmem:[%s1 + $0x110] sm:$0xf]
        %v412 = vld [vmem:[%s1 + $0x114] sm:$0xf]
        %v413 = vld [vmem:[%s1 + $0x118] sm:$0xf]
        %v414 = vld [vmem:[%s1 + $0x11c] sm:$0xf]
        %v415 = vld [vmem:[%s1 + $0x120] sm:$0xf]
        %v416 = vld [vmem:[%s1 + $0x124] sm:$0xf]
        %v417 = vld [vmem:[%s1 + $0x128] sm:$0xf]
        %v418 = vld [vmem:[%s1 + $0x12c] sm:$0xf]
        %v419 = vld [vmem:[%s1 + $0x130] sm:$0xf]
        %v420 = vld [vmem:[%s1 + $0x134] sm:$0xf]
        %v421 = vld [vmem:[%s1 + $0x138] sm:$0xf]
        %v422 = vld [vmem:[%s1 + $0x13c] sm:$0xf]
        %v423 = vld [vmem:[%s1 + $0x140] sm:$0xf]
        %v424 = vld [vmem:[%s1 + $0x144] sm:$0xf]
        %v425 = vld [vmem:[%s1 + $0x148] sm:$0xf]
        %v426 = vld [vmem:[%s1 + $0x14c] sm:$0xf]
        %v427 = vld [vmem:[%s1 + $0x150] sm:$0xf]
        %v428 = vld [vmem:[%s1 + $0x154] sm:$0xf]
        %v429 = vld [vmem:[%s1 + $0x158] sm:$0xf]
        %v430 = vld [vmem:[%s1 + $0x15c] sm:$0xf]
        %v431 = vld [vmem:[%s1 + $0x160] sm:$0xf]
        %v432 = vld [vmem:[%s1 + $0x164] sm:$0xf]
        %v433 = vld [vmem:[%s1 + $0x168] sm:$0xf]
        %v434 = vld [vmem:[%s1 + $0x16c] sm:$0xf]
        %v435 = vld [vmem:[%s1 + $0x170] sm:$0xf]
        %v436 = vld [vmem:[%s1 + $0x174] sm:$0xf]
        %v437 = vld [vmem:[%s1 + $0x178] sm:$0xf]
        %v438 = vld [vmem:[%s1 + $0x17c] sm:$0xf]
        %v439 = vld [vmem:[%s1 + $0x180] sm:$0xf]
        %v440 = vld [vmem:[%s1 + $0x184] sm:$0xf]
        %v441 = vld [vmem:[%s1 + $0x188] sm:$0xf]
        %v442 = vld [vmem:[%s1 + $0x18c] sm:$0xf]
        %v444 = vcombine.high %v342, %v342
        %v446 = vunpack.c.l.s4 1966171168
        %v447 = vunpack.c.0.s8 %v446
        %v448 = vlaneseq
        %v449 = vshrl.u32 %v448, 7
        %v450 = vsub.s32 %v447, %v449
        %v451 = vrot.slane %v342, %v450
        %v453 = vunpack.c.l.s4 1966171168
        %v454 = vunpack.c.0.s8 %v453
        %v455 = vlaneseq
        %v456 = vshrl.u32 %v455, 7
        %v457 = vsub.s32 %v454, %v456
        %v458 = vrot.slane %v444, %v457
        %v459 = vcombine.high %v451, %v451
        %v460 = vcombine.high %v458, %v458
        %v462 = vunpack.c.l.s4 1966171168
        %v463 = vunpack.c.0.s8 %v462
        %v464 = vlaneseq
        %v465 = vshrl.u32 %v464, 7
        %v466 = vsub.s32 %v463, %v465
        %v467 = vrot.slane %v451, %v466
        %v469 = vunpack.c.l.s4 1966171168
        %v470 = vunpack.c.0.s8 %v469
        %v471 = vlaneseq
        %v472 = vshrl.u32 %v471, 7
        %v473 = vsub.s32 %v470, %v472
        %v474 = vrot.slane %v458, %v473
        %v476 = vunpack.c.l.s4 1966171168
        %v477 = vunpack.c.0.s8 %v476
        %v478 = vlaneseq
        %v479 = vshrl.u32 %v478, 7
        %v480 = vsub.s32 %v477, %v479
        %v481 = vrot.slane %v459, %v480
        %v483 = vunpack.c.l.s4 1966171168
        %v484 = vunpack.c.0.s8 %v483
        %v485 = vlaneseq
        %v486 = vshrl.u32 %v485, 7
        %v487 = vsub.s32 %v484, %v486
        %v488 = vrot.slane %v460, %v487
        %v489 = vcombine.high %v467, %v467
        %v490 = vcombine.high %v474, %v474
        %v491 = vcombine.high %v481, %v481
        %v598 = vunpack.c.l.b16 %v343
        %v599 = vunpack.c.l.b16 %v344
        %v600 = vunpack.c.l.b16 %v345
        %v601 = vunpack.c.l.b16 %v346
        %v602 = vunpack.c.l.b16 %v347
        %v603 = vunpack.c.l.b16 %v348
        %v604 = vunpack.c.l.b16 %v349
        %v605 = vunpack.c.l.b16 %v350
        %v606 = vunpack.c.l.b16 %v351
        %v607 = vunpack.c.l.b16 %v352
        %v608 = vunpack.c.l.b16 %v353
        %v609 = vunpack.c.l.b16 %v354
        %v610 = vunpack.c.l.b16 %v355
        %v611 = vunpack.c.l.b16 %v356
        %v612 = vunpack.c.l.b16 %v357
        %v613 = vunpack.c.l.b16 %v358
        %v614 = vunpack.c.l.b16 %v359
        %v615 = vunpack.c.l.b16 %v360
        %v616 = vunpack.c.l.b16 %v361
        %v617 = vunpack.c.l.b16 %v362
        %v618 = vunpack.c.l.b16 %v363
        %v619 = vunpack.c.l.b16 %v364
        %v620 = vunpack.c.l.b16 %v365
        %v621 = vunpack.c.l.b16 %v366
        %v622 = vunpack.c.l.b16 %v367
        %v623 = vunpack.c.l.b16 %v368
        %v624 = vunpack.c.l.b16 %v369
        %v625 = vunpack.c.l.b16 %v370
        %v626 = vunpack.c.l.b16 %v371
        %v627 = vunpack.c.l.b16 %v372
        %v628 = vunpack.c.l.b16 %v373
        %v629 = vunpack.c.l.b16 %v374
        %v630 = vunpack.c.l.b16 %v375
        %v631 = vunpack.c.l.b16 %v376
        %v632 = vunpack.c.l.b16 %v377
        %v633 = vunpack.c.l.b16 %v378
        %v634 = vunpack.c.l.b16 %v379
        %v635 = vunpack.c.l.b16 %v380
        %v636 = vunpack.c.l.b16 %v381
        %v637 = vunpack.c.l.b16 %v382
        %v638 = vunpack.c.l.b16 %v383
        %v639 = vunpack.c.l.b16 %v384
        %v640 = vunpack.c.l.b16 %v385
        %v641 = vunpack.c.l.b16 %v386
        %v642 = vunpack.c.l.b16 %v387
        %v643 = vunpack.c.l.b16 %v388
        %v644 = vunpack.c.l.b16 %v389
        %v645 = vunpack.c.l.b16 %v390
        %v646 = vunpack.c.l.b16 %v391
        %v647 = vunpack.c.l.b16 %v392
        %v648 = vunpack.c.l.b16 %v393
        %v649 = vunpack.c.l.b16 %v394
        %v650 = vunpack.c.l.b16 %v395
        %v651 = vunpack.c.l.b16 %v396
        %v652 = vunpack.c.l.b16 %v397
        %v653 = vunpack.c.l.b16 %v398
        %v654 = vunpack.c.l.b16 %v399
        %v655 = vunpack.c.l.b16 %v400
        %v656 = vunpack.c.l.b16 %v401
        %v657 = vunpack.c.l.b16 %v402
        %v658 = vunpack.c.l.b16 %v403
        %v659 = vunpack.c.l.b16 %v404
        %v660 = vunpack.c.l.b16 %v405
        %v661 = vunpack.c.l.b16 %v406
        %v662 = vunpack.c.l.b16 %v407
        %v663 = vunpack.c.l.b16 %v408
        %v664 = vunpack.c.l.b16 %v409
        %v665 = vunpack.c.l.b16 %v410
        %v666 = vunpack.c.l.b16 %v411
        %v667 = vunpack.c.l.b16 %v412
        %v668 = vunpack.c.l.b16 %v413
        %v669 = vunpack.c.l.b16 %v414
        %v670 = vunpack.c.l.b16 %v415
        %v671 = vunpack.c.l.b16 %v416
        %v672 = vunpack.c.l.b16 %v417
        %v673 = vunpack.c.l.b16 %v418
        %v674 = vunpack.c.l.b16 %v419
        %v675 = vunpack.c.l.b16 %v420
        %v676 = vunpack.c.l.b16 %v421
        %v677 = vunpack.c.l.b16 %v422
        %v678 = vunpack.c.l.b16 %v423
        %v679 = vunpack.c.l.b16 %v424
        %v680 = vunpack.c.l.b16 %v425
        %v681 = vunpack.c.l.b16 %v426
        %v682 = vunpack.c.l.b16 %v427
        %v683 = vunpack.c.l.b16 %v428
        %v684 = vunpack.c.l.b16 %v429
        %v685 = vunpack.c.l.b16 %v430
        %v686 = vunpack.c.l.b16 %v431
        %v687 = vunpack.c.l.b16 %v432
        %v688 = vunpack.c.l.b16 %v433
        %v689 = vunpack.c.l.b16 %v434
        %v690 = vunpack.c.l.b16 %v435
        %v691 = vunpack.c.l.b16 %v436
        %v692 = vunpack.c.l.b16 %v437
        %v693 = vunpack.c.l.b16 %v438
        %v694 = vunpack.c.l.b16 %v439
        %v695 = vunpack.c.l.b16 %v440
        %v696 = vunpack.c.l.b16 %v441
        %v697 = vunpack.c.l.b16 %v442
        %v698 = vpack.c.b16 %v599, %v598
        %v699 = vpack.c.b16 %v601, %v600
        %v700 = vpack.c.b16 %v603, %v602
        %v701 = vpack.c.b16 %v605, %v604
        %v702 = vpack.c.b16 %v607, %v606
        %v703 = vpack.c.b16 %v609, %v608
        %v704 = vpack.c.b16 %v611, %v610
        %v705 = vpack.c.b16 %v613, %v612
        %v706 = vpack.c.b16 %v615, %v614
        %v707 = vpack.c.b16 %v617, %v616
        %v708 = vpack.c.b16 %v619, %v618
        %v709 = vpack.c.b16 %v621, %v620
        %v710 = vpack.c.b16 %v623, %v622
        %v711 = vpack.c.b16 %v625, %v624
        %v712 = vpack.c.b16 %v627, %v626
        %v713 = vpack.c.b16 %v629, %v628
        %v714 = vpack.c.b16 %v631, %v630
        %v715 = vpack.c.b16 %v633, %v632
        %v716 = vpack.c.b16 %v635, %v634
        %v717 = vpack.c.b16 %v637, %v636
        %v718 = vpack.c.b16 %v639, %v638
        %v719 = vpack.c.b16 %v641, %v640
        %v720 = vpack.c.b16 %v643, %v642
        %v721 = vpack.c.b16 %v645, %v644
        %v722 = vpack.c.b16 %v647, %v646
        %v723 = vpack.c.b16 %v649, %v648
        %v724 = vpack.c.b16 %v651, %v650
        %v725 = vpack.c.b16 %v653, %v652
        %v726 = vpack.c.b16 %v655, %v654
        %v727 = vpack.c.b16 %v657, %v656
        %v728 = vpack.c.b16 %v659, %v658
        %v729 = vpack.c.b16 %v661, %v660
        %v730 = vpack.c.b16 %v663, %v662
        %v731 = vpack.c.b16 %v665, %v664
        %v732 = vpack.c.b16 %v667, %v666
        %v733 = vpack.c.b16 %v669, %v668
        %v734 = vpack.c.b16 %v671, %v670
        %v735 = vpack.c.b16 %v673, %v672
        %v736 = vpack.c.b16 %v675, %v674
        %v737 = vpack.c.b16 %v677, %v676
        %v738 = vpack.c.b16 %v679, %v678
        %v739 = vpack.c.b16 %v681, %v680
        %v740 = vpack.c.b16 %v683, %v682
        %v741 = vpack.c.b16 %v685, %v684
        %v742 = vpack.c.b16 %v687, %v686
        %v743 = vpack.c.b16 %v689, %v688
        %v744 = vpack.c.b16 %v691, %v690
        %v745 = vpack.c.b16 %v693, %v692
        %v746 = vpack.c.b16 %v695, %v694
        %v747 = vpack.c.b16 %v697, %v696
        %vm798 = vcmask 261120
        %v800 = vsel %vm798, %v490, 0
        %802 = vmatprep.subr.bf16.mxu0 0
        %803 = vmatpush1.bf16.msra.mxu0 %v705
        %804 = vmatprep.subr.bf16.mxu0 0
        %805 = vmatpush1.bf16.msra.mxu0 %v704
        %806 = vmatprep.subr.bf16.mxu0 0
        %807 = vmatpush1.bf16.msra.mxu0 %v703
        %808 = vmatprep.subr.bf16.mxu0 0
        %809 = vmatpush1.bf16.msra.mxu0 %v702
        %810 = vmatprep.subr.bf16.mxu0 0
        %811 = vmatpush1.bf16.msra.mxu0 %v701
        %812 = vmatprep.subr.bf16.mxu0 0
        %813 = vmatpush1.bf16.msra.mxu0 %v700
        %814 = vmatprep.subr.bf16.mxu0 0
        %815 = vmatpush1.bf16.msra.mxu0 %v699
        %816 = vmatprep.subr.bf16.mxu0 0
        %817 = vmatpush1.bf16.msra.mxu0 %v698
        %818 = vmatprep.subr.bf16.mxu0 0
        %819 = vmatpush2.bf16.msra.mxu0 %v713
        %820 = vmatprep.subr.bf16.mxu0 0
        %821 = vmatpush2.bf16.msra.mxu0 %v712
        %822 = vmatprep.subr.bf16.mxu0 0
        %823 = vmatpush2.bf16.msra.mxu0 %v711
        %824 = vmatprep.subr.bf16.mxu0 0
        %825 = vmatpush2.bf16.msra.mxu0 %v710
        %826 = vmatprep.subr.bf16.mxu0 0
        %827 = vmatpush2.bf16.msra.mxu0 %v709
        %828 = vmatprep.subr.bf16.mxu0 0
        %829 = vmatpush2.bf16.msra.mxu0 %v708
        %830 = vmatprep.subr.bf16.mxu0 0
        %831 = vmatpush2.bf16.msra.mxu0 %v707
        %832 = vmatprep.subr.bf16.mxu0 0
        %833 = vmatpush2.bf16.msra.mxu0 %v706
        %834 = vmatprep.mubr.bf16.mxu0 %v481
        %835 = vmatmul.mubr.bf16.gmra.mxu0 %v467
        %v836 = vpop.f32.mrf.mxu0
        %v837 = vadd.f32 0.0, %v836
        %v838 = vpop.f32.mrf.mxu0
        %v839 = vpop.f32.mrf.mxu0
        %v840 = vpop.f32.mrf.mxu0
        %841 = vdwg.mxu0
        %842 = vmatprep.subr.bf16.mxu0 0
        %843 = vmatpush1.bf16.msra.mxu0 %v721
        %844 = vmatprep.subr.bf16.mxu0 0
        %845 = vmatpush1.bf16.msra.mxu0 %v720
        %846 = vmatprep.subr.bf16.mxu0 0
        %847 = vmatpush1.bf16.msra.mxu0 %v719
        %848 = vmatprep.subr.bf16.mxu0 0
        %849 = vmatpush1.bf16.msra.mxu0 %v718
        %850 = vmatprep.subr.bf16.mxu0 0
        %851 = vmatpush1.bf16.msra.mxu0 %v717
        %852 = vmatprep.subr.bf16.mxu0 0
        %853 = vmatpush1.bf16.msra.mxu0 %v716
        %854 = vmatprep.subr.bf16.mxu0 0
        %855 = vmatpush1.bf16.msra.mxu0 %v715
        %856 = vmatprep.subr.bf16.mxu0 0
        %857 = vmatpush1.bf16.msra.mxu0 %v714
        %858 = vmatprep.subr.bf16.mxu0 0
        %859 = vmatpush2.bf16.msra.mxu0 %v729
        %860 = vmatprep.subr.bf16.mxu0 0
        %861 = vmatpush2.bf16.msra.mxu0 %v728
        %862 = vmatprep.subr.bf16.mxu0 0
        %863 = vmatpush2.bf16.msra.mxu0 %v727
        %864 = vmatprep.subr.bf16.mxu0 0
        %865 = vmatpush2.bf16.msra.mxu0 %v726
        %866 = vmatprep.subr.bf16.mxu0 0
        %867 = vmatpush2.bf16.msra.mxu0 %v725
        %868 = vmatprep.subr.bf16.mxu0 0
        %869 = vmatpush2.bf16.msra.mxu0 %v724
        %870 = vmatprep.subr.bf16.mxu0 0
        %871 = vmatpush2.bf16.msra.mxu0 %v723
        %872 = vmatprep.subr.bf16.mxu0 0
        %873 = vmatpush2.bf16.msra.mxu0 %v722
        %874 = vmatprep.mubr.bf16.mxu0 %v491
        %875 = vmatmul.mubr.bf16.gmra.mxu0 %v489
        %v876 = vpop.f32.mrf.mxu0
        %v877 = vadd.f32 %v837, %v876
        %v878 = vpop.f32.mrf.mxu0
        %v879 = vpop.f32.mrf.mxu0
        %v880 = vpop.f32.mrf.mxu0
        %881 = vdwg.mxu0
        %882 = vmatprep.subr.bf16.mxu0 0
        %883 = vmatpush1.bf16.msra.mxu0 %v737
        %884 = vmatprep.subr.bf16.mxu0 0
        %885 = vmatpush1.bf16.msra.mxu0 %v736
        %886 = vmatprep.subr.bf16.mxu0 0
        %887 = vmatpush1.bf16.msra.mxu0 %v735
        %888 = vmatprep.subr.bf16.mxu0 0
        %889 = vmatpush1.bf16.msra.mxu0 %v734
        %890 = vmatprep.subr.bf16.mxu0 0
        %891 = vmatpush1.bf16.msra.mxu0 %v733
        %892 = vmatprep.subr.bf16.mxu0 0
        %893 = vmatpush1.bf16.msra.mxu0 %v732
        %894 = vmatprep.subr.bf16.mxu0 0
        %895 = vmatpush1.bf16.msra.mxu0 %v731
        %896 = vmatprep.subr.bf16.mxu0 0
        %897 = vmatpush1.bf16.msra.mxu0 %v730
        %898 = vmatprep.subr.bf16.mxu0 0
        %899 = vmatpush2.bf16.msra.mxu0 %v745
        %900 = vmatprep.subr.bf16.mxu0 0
        %901 = vmatpush2.bf16.msra.mxu0 %v744
        %902 = vmatprep.subr.bf16.mxu0 0
        %903 = vmatpush2.bf16.msra.mxu0 %v743
        %904 = vmatprep.subr.bf16.mxu0 0
        %905 = vmatpush2.bf16.msra.mxu0 %v742
        %906 = vmatprep.subr.bf16.mxu0 0
        %907 = vmatpush2.bf16.msra.mxu0 %v741
        %908 = vmatprep.subr.bf16.mxu0 0
        %909 = vmatpush2.bf16.msra.mxu0 %v740
        %910 = vmatprep.subr.bf16.mxu0 0
        %911 = vmatpush2.bf16.msra.mxu0 %v739
        %912 = vmatprep.subr.bf16.mxu0 0
        %913 = vmatpush2.bf16.msra.mxu0 %v738
        %914 = vmatprep.mubr.bf16.mxu0 %v488
        %915 = vmatmul.mubr.bf16.gmra.mxu0 %v474
        %v916 = vpop.f32.mrf.mxu0
        %v917 = vadd.f32 %v877, %v916
        %v918 = vpop.f32.mrf.mxu0
        %v919 = vpop.f32.mrf.mxu0
        %v920 = vpop.f32.mrf.mxu0
        %921 = vdwg.mxu0
        %922 = vmatprep.subr.bf16.mxu0 0
        %923 = vmatpush1.bf16.msra.mxu0 0
        %924 = vmatprep.subr.bf16.mxu0 0
        %925 = vmatpush1.bf16.msra.mxu0 0
        %926 = vmatprep.subr.bf16.mxu0 0
        %927 = vmatpush1.bf16.msra.mxu0 0
        %928 = vmatprep.subr.bf16.mxu0 0
        %929 = vmatpush1.bf16.msra.mxu0 0
        %930 = vmatprep.subr.bf16.mxu0 0
        %931 = vmatpush1.bf16.msra.mxu0 0
        %932 = vmatprep.subr.bf16.mxu0 0
        %933 = vmatpush1.bf16.msra.mxu0 0
        %934 = vmatprep.subr.bf16.mxu0 0
        %935 = vmatpush1.bf16.msra.mxu0 %v747
        %936 = vmatprep.subr.bf16.mxu0 0
        %937 = vmatpush1.bf16.msra.mxu0 %v746
        %938 = vmatprep.subr.bf16.mxu0 0
        %939 = vmatpush2.bf16.msra.mxu0 0
        %940 = vmatprep.subr.bf16.mxu0 0
        %941 = vmatpush2.bf16.msra.mxu0 0
        %942 = vmatprep.subr.bf16.mxu0 0
        %943 = vmatpush2.bf16.msra.mxu0 0
        %944 = vmatprep.subr.bf16.mxu0 0
        %945 = vmatpush2.bf16.msra.mxu0 0
        %946 = vmatprep.subr.bf16.mxu0 0
        %947 = vmatpush2.bf16.msra.mxu0 0
        %948 = vmatprep.subr.bf16.mxu0 0
        %949 = vmatpush2.bf16.msra.mxu0 0
        %950 = vmatprep.subr.bf16.mxu0 0
        %951 = vmatpush2.bf16.msra.mxu0 0
        %952 = vmatprep.subr.bf16.mxu0 0
        %953 = vmatpush2.bf16.msra.mxu0 0
        %954 = vmatprep.mubr.bf16.mxu0 0
        %955 = vmatmul.mubr.bf16.gmra.mxu0 %v800
        %v956 = vpop.f32.mrf.mxu0
        %v957 = vadd.f32 %v917, %v956
        %v958 = vpop.f32.mrf.mxu0
        %v959 = vpop.f32.mrf.mxu0
        %v960 = vpop.f32.mrf.mxu0
        %961 = vdwg.mxu0
        %v962 = vld [vmem:[%s2] sm:$0x1]
        %v964 = vlaneseq
        %v965 = vshrl.u32 %v964, 7
        %v966 = vsub.s32 0, %v965
        %v967 = vrot.slane %v962, %v966
        %v969 = vmul.f32 %v957, %v967
        %v970 = vld [vmem:[%s3] sm:$0x1]
        %v972 = vlaneseq
        %v973 = vshrl.u32 %v972, 7
        %v974 = vsub.s32 0, %v973
        %v975 = vrot.slane %v970, %v974
        %v977 = vadd.f32 %v969, %v975
        %vm978 = vcmp.gt.f32.partialorder %v977, 0.0
        %v979 = vmul.f32 %v977, 0.05
        %v980 = vsel %vm978, %v977, %v979
        %v981 = vld [vmem:[#allocation2] sm:$0x3]
        %v982 = vpack.c.bf16 %v980, %v980
        %v983 = vld [vmem:[%s335] sm:$0xf]
        %v984 = vld [vmem:[%s335 + $0x4] sm:$0xf]
        %v985 = vld [vmem:[%s335 + $0x8] sm:$0xf]
        %v986 = vld [vmem:[%s335 + $0xc] sm:$0xf]
        %v987 = vld [vmem:[%s335 + $0x10] sm:$0xf]
        %v988 = vld [vmem:[%s335 + $0x14] sm:$0xf]
        %v989 = vld [vmem:[%s335 + $0x18] sm:$0xf]
        %v990 = vld [vmem:[%s335 + $0x1c] sm:$0xf]
        %v999 = vunpack.c.l.b16 %v983
        %v1000 = vunpack.c.l.b16 %v984
        %v1001 = vunpack.c.l.b16 %v985
        %v1002 = vunpack.c.l.b16 %v986
        %v1003 = vunpack.c.l.b16 %v987
        %v1004 = vunpack.c.l.b16 %v988
        %v1005 = vunpack.c.l.b16 %v989
        %v1006 = vunpack.c.l.b16 %v990
        %v1007 = vpack.c.b16 %v1000, %v999
        %v1008 = vpack.c.b16 %v1002, %v1001
        %v1009 = vpack.c.b16 %v1004, %v1003
        %v1010 = vpack.c.b16 %v1006, %v1005
        %vm1015 = vcmask 523264
        %v1017 = vsel %vm1015, %v982, 0
        %1019 = vmatprep.subr.bf16.mxu0 0
        %1020 = vmatpush1.bf16.msra.mxu0 0
        %1021 = vmatprep.subr.bf16.mxu0 0
        %1022 = vmatpush1.bf16.msra.mxu0 0
        %1023 = vmatprep.subr.bf16.mxu0 0
        %1024 = vmatpush1.bf16.msra.mxu0 0
        %1025 = vmatprep.subr.bf16.mxu0 0
        %1026 = vmatpush1.bf16.msra.mxu0 0
        %1027 = vmatprep.subr.bf16.mxu0 0
        %1028 = vmatpush1.bf16.msra.mxu0 %v1010
        %1029 = vmatprep.subr.bf16.mxu0 0
        %1030 = vmatpush1.bf16.msra.mxu0 %v1009
        %1031 = vmatprep.subr.bf16.mxu0 0
        %1032 = vmatpush1.bf16.msra.mxu0 %v1008
        %1033 = vmatprep.subr.bf16.mxu0 0
        %1034 = vmatpush1.bf16.msra.mxu0 %v1007
        %1035 = vmatprep.subr.bf16.mxu0 0
        %1036 = vmatpush2.bf16.msra.mxu0 0
        %1037 = vmatprep.subr.bf16.mxu0 0
        %1038 = vmatpush2.bf16.msra.mxu0 0
        %1039 = vmatprep.subr.bf16.mxu0 0
        %1040 = vmatpush2.bf16.msra.mxu0 0
        %1041 = vmatprep.subr.bf16.mxu0 0
        %1042 = vmatpush2.bf16.msra.mxu0 0
        %1043 = vmatprep.subr.bf16.mxu0 0
        %1044 = vmatpush2.bf16.msra.mxu0 0
        %1045 = vmatprep.subr.bf16.mxu0 0
        %1046 = vmatpush2.bf16.msra.mxu0 0
        %1047 = vmatprep.subr.bf16.mxu0 0
        %1048 = vmatpush2.bf16.msra.mxu0 0
        %1049 = vmatprep.subr.bf16.mxu0 0
        %1050 = vmatpush2.bf16.msra.mxu0 0
        %1051 = vmatprep.mubr.bf16.mxu0 0
        %1052 = vmatmul.mubr.bf16.gmra.mxu0 %v1017
        %v1053 = vpop.f32.mrf.mxu0
        %v1054 = vadd.f32 0.0, %v1053
        %v1055 = vpop.f32.mrf.mxu0
        %v1056 = vpop.f32.mrf.mxu0
        %v1057 = vpop.f32.mrf.mxu0
        %1058 = vdwg.mxu0
        %v1059 = vadd.f32 %v981, %v1054
        %1060 = vst [vmem:[#allocation2] sm:$0x3] %v1059
        %p1061 = scmp.eq.s32.totalorder %s21, 15
        // Predicated region
        $region61: #{_lambda_.5} parent=55 // pred_check
          %p1062 = pneg %p1061
        $region62: #{_lambda_.5} parent=55 // pred_check_branch
          %1064 = sbr.rel (%p1062) target = $region64
        $region63: #{_lambda_.5} parent=55 // pred_region
          %v1065 = vld [vmem:[#allocation2] sm:$0x3]
          %v1066 = vld [vmem:[%s5] sm:$0x1]
          %v1068 = vlaneseq
          %v1069 = vshrl.u32 %v1068, 7
          %v1070 = vsub.s32 0, %v1069
          %v1071 = vrot.slane %v1066, %v1070
          %v1073 = vmul.f32 %v1065, %v1071
          %v1074 = vld [vmem:[%s6] sm:$0x1]
          %v1076 = vlaneseq
          %v1077 = vshrl.u32 %v1076, 7
          %v1078 = vsub.s32 0, %v1077
          %v1079 = vrot.slane %v1074, %v1078
          %v1081 = vadd.f32 %v1073, %v1079
          %vm1082 = vcmp.gt.f32.partialorder %v1081, 0.0
          %v1083 = vmul.f32 %v1081, 0.05
          %v1084 = vsel %vm1082, %v1081, %v1083
          %v1085 = vpack.c.bf16 %v1084, %v1084
          %v1086 = vld [vmem:[%s7] sm:$0xf]
          %v1087 = vld [vmem:[%s7 + $0x4] sm:$0xf]
          %v1088 = vld [vmem:[%s7 + $0x8] sm:$0xf]
          %v1089 = vld [vmem:[%s7 + $0xc] sm:$0xf]
          %v1090 = vld [vmem:[%s7 + $0x10] sm:$0xf]
          %v1091 = vld [vmem:[%s7 + $0x14] sm:$0xf]
          %v1092 = vld [vmem:[%s7 + $0x18] sm:$0xf]
          %v1093 = vld [vmem:[%s7 + $0x1c] sm:$0xf]
          %v1094 = vld [vmem:[%s7 + $0x20] sm:$0xf]
          %v1095 = vld [vmem:[%s7 + $0x24] sm:$0xf]
          %v1096 = vld [vmem:[%s7 + $0x28] sm:$0xf]
          %v1097 = vld [vmem:[%s7 + $0x2c] sm:$0xf]
          %v1098 = vld [vmem:[%s7 + $0x30] sm:$0xf]
          %v1099 = vld [vmem:[%s7 + $0x34] sm:$0xf]
          %v1100 = vld [vmem:[%s7 + $0x38] sm:$0xf]
          %v1101 = vld [vmem:[%s7 + $0x3c] sm:$0xf]
          %v1102 = vld [vmem:[%s8] sm:$0x1]
          %v1104 = vlaneseq
          %v1105 = vshrl.u32 %v1104, 7
          %v1106 = vsub.s32 0, %v1105
          %v1107 = vrot.slane %v1102, %v1106
          %v1125 = vunpack.c.l.b16 %v1086
          %v1126 = vunpack.c.l.b16 %v1087
          %v1127 = vunpack.c.l.b16 %v1088
          %v1128 = vunpack.c.l.b16 %v1089
          %v1129 = vunpack.c.l.b16 %v1090
          %v1130 = vunpack.c.l.b16 %v1091
          %v1131 = vunpack.c.l.b16 %v1092
          %v1132 = vunpack.c.l.b16 %v1093
          %v1133 = vunpack.c.l.b16 %v1094
          %v1134 = vunpack.c.l.b16 %v1095
          %v1135 = vunpack.c.l.b16 %v1096
          %v1136 = vunpack.c.l.b16 %v1097
          %v1137 = vunpack.c.l.b16 %v1098
          %v1138 = vunpack.c.l.b16 %v1099
          %v1139 = vunpack.c.l.b16 %v1100
          %v1140 = vunpack.c.l.b16 %v1101
          %v1141 = vpack.c.b16 %v1126, %v1125
          %v1142 = vpack.c.b16 %v1128, %v1127
          %v1143 = vpack.c.b16 %v1130, %v1129
          %v1144 = vpack.c.b16 %v1132, %v1131
          %v1145 = vpack.c.b16 %v1134, %v1133
          %v1146 = vpack.c.b16 %v1136, %v1135
          %v1147 = vpack.c.b16 %v1138, %v1137
          %v1148 = vpack.c.b16 %v1140, %v1139
          %1157 = vmatprep.subr.bf16.mxu0 0
          %1158 = vmatpush1.bf16.msra.mxu0 %v1148
          %1159 = vmatprep.subr.bf16.mxu0 0
          %1160 = vmatpush1.bf16.msra.mxu0 %v1147
          %1161 = vmatprep.subr.bf16.mxu0 0
          %1162 = vmatpush1.bf16.msra.mxu0 %v1146
          %1163 = vmatprep.subr.bf16.mxu0 0
          %1164 = vmatpush1.bf16.msra.mxu0 %v1145
          %1165 = vmatprep.subr.bf16.mxu0 0
          %1166 = vmatpush1.bf16.msra.mxu0 %v1144
          %1167 = vmatprep.subr.bf16.mxu0 0
          %1168 = vmatpush1.bf16.msra.mxu0 %v1143
          %1169 = vmatprep.subr.bf16.mxu0 0
          %1170 = vmatpush1.bf16.msra.mxu0 %v1142
          %1171 = vmatprep.subr.bf16.mxu0 0
          %1172 = vmatpush1.bf16.msra.mxu0 %v1141
          %1173 = vmatprep.subr.bf16.mxu0 0
          %1174 = vmatpush2.bf16.msra.mxu0 0
          %1175 = vmatprep.subr.bf16.mxu0 0
          %1176 = vmatpush2.bf16.msra.mxu0 0
          %1177 = vmatprep.subr.bf16.mxu0 0
          %1178 = vmatpush2.bf16.msra.mxu0 0
          %1179 = vmatprep.subr.bf16.mxu0 0
          %1180 = vmatpush2.bf16.msra.mxu0 0
          %1181 = vmatprep.subr.bf16.mxu0 0
          %1182 = vmatpush2.bf16.msra.mxu0 0
          %1183 = vmatprep.subr.bf16.mxu0 0
          %1184 = vmatpush2.bf16.msra.mxu0 0
          %1185 = vmatprep.subr.bf16.mxu0 0
          %1186 = vmatpush2.bf16.msra.mxu0 0
          %1187 = vmatprep.subr.bf16.mxu0 0
          %1188 = vmatpush2.bf16.msra.mxu0 0
          %1189 = vmatprep.mubr.bf16.mxu0 0
          %1190 = vmatmul.mubr.bf16.gmra.mxu0 %v1085
          %v1191 = vpop.f32.mrf.mxu0
          %v1192 = vadd.f32 %v1107, %v1191
          %v1193 = vpop.f32.mrf.mxu0
          %v1194 = vpop.f32.mrf.mxu0
          %v1195 = vpop.f32.mrf.mxu0
          %1196 = vdwg.mxu0
          %vm1197 = vcmask 82944
          %1198 = vst.msk [vmem:[#allocation3] sm:$0x3] %vm1197, %v1192
        $region64: #{_lambda_.5} parent=55 // pred_fallthru
          _
        // Predicated region
        $region65: #{_lambda_.5} parent=55 // pred_check
          %p1199 = pneg %p233
        $region66: #{_lambda_.5} parent=55 // pred_check_branch
          %1201 = sbr.rel (%p1199) target = $region68
        $region67: #{_lambda_.5} parent=55 // pred_region
          %s1203 = ssub.s32 32, 32
          %1204 = vsyncadd [#allocation4], %s1203
          %s1206 = sshll.u32 [#allocation3], 4
          %s1207 = int_to_ptr.vmem [resolvable:$true] %s1206
          %1209 = dma.vmem_to_hbm [thread:$0]  %s1207, 32, %s9, [#allocation4]
        $region68: #{_lambda_.5} parent=55 // pred_fallthru
          _
        // Predicated region
        $region69: #{_lambda_.5} parent=55 // pred_check
          %p1210 = pneg %p233
        $region70: #{_lambda_.5} parent=55 // pred_check_branch
          %1212 = sbr.rel (%p1210) target = $region72
        $region71: #{_lambda_.5} parent=55 // pred_region
          %1213 = dma.done [#allocation4], 32
        $region72: #{_lambda_.5} parent=55 // pred_fallthru
          _
      $region56: #{_lambda_.5} parent=5 // pred_fallthru
        _
      %p1214 = scmp.le.s32.totalorder 2, %s16
      // Predicated region
      $region73: #{_lambda_.5} parent=5 // pred_check
        %p1215 = pneg %p1214
      $region74: #{_lambda_.5} parent=5 // pred_check_branch
        %1217 = sbr.rel (%p1215) target = $region76
      $region75: #{_lambda_.5} parent=5 // pred_region
        %s1218 = ssub.s32 %s16, 2
      $region76: #{_lambda_.5} parent=5 // pred_fallthru
        _
    $region6: #{_lambda_.5} parent=1 // loop_footer
      %s20 = sadd.s32 1, %s16
    $region7: #{_lambda_.5} parent=1 // loop_footer_branch
      %15 = sbr.rel target = $region3
    $region8: #{_lambda_.5} parent=1 // loop_exit
      _
    %1219 = vsyncpa [#allocation4], 1
    %s1220 = scalar_lea.sflag [#allocation4], 1
    %1221 = vsyncpa %s1220, 1

</llo_original>
